<compile_context>
chip_gen: v6e
topology: v6e:2x2x1
jax: 0.10.0
libtpu: 0.0.40
codegen_flags: <defaults>
</compile_context>

<pallas_src>
from functools import partial

import jax
import jax.numpy as jnp
from jax.experimental import pallas as pl
from jax.experimental.pallas import tpu as pltpu


def pointset_cls_kernel(x_ref, w1_ref, b1_ref, w2_ref, b2_ref, w3_ref, b3_ref,
                        fw1_ref, fb1_ref, fw2_ref, fb2_ref, out_ref,
                        *, k_classes, compute_dtype):
    tb, _, n = x_ref.shape                                    # (TB, 3, N)

    # ---- pi layer 1, on the native NCW tile (points on lanes).
    x = x_ref[...].astype(jnp.float32)                        # (TB, 3, N)
    # per-sample, per-feature max over the point set: lane reduction
    x = x - jnp.max(x, axis=2, keepdims=True)
    # points-on-lanes -> channels-on-lanes: one tiny XLU transpose per sample,
    # then a free reshape (N % 16 == 0) and a standard K=3 MXU matmul.
    xt = jnp.transpose(x, (0, 2, 1)).reshape(tb * n, 3)       # (TB*N, 3)
    h = jnp.dot(xt.astype(compute_dtype), w1_ref[...],
                preferred_element_type=jnp.float32) + b1_ref[...]
    h = jnp.tanh(h.astype(compute_dtype))                     # (TB*N, 64)

    # ---- pi layers 2 & 3: max-subtract over points, 1x1 conv as MXU matmul.
    def pi_layer(h, w_ref, b_ref):
        c = h.shape[-1]
        hb = h.reshape(tb, n, c)                              # free view
        # per-sample, per-feature max over points (never over the merged TB*N)
        hb = hb - jnp.max(hb, axis=1, keepdims=True)
        out = jnp.dot(hb.reshape(tb * n, c), w_ref[...],
                      preferred_element_type=jnp.float32) + b_ref[...]
        return jnp.tanh(out.astype(compute_dtype))

    h = pi_layer(h, w2_ref, b2_ref)                           # (TB*N, 128)
    h = pi_layer(h, w3_ref, b3_ref)                           # (TB*N, 256)

    # ---- MaxPool1d(num_points): max over all points per sample.
    g = jnp.max(h.reshape(tb, n, h.shape[-1]), axis=1)        # (TB, 256)
    # TODO(synk): F.dropout(p=0.5) (training=True in the PyTorch default) is
    # implemented as the deterministic inference-mode identity.

    # ---- classifier head, batched: M = TB rows.
    f = jnp.tanh((jnp.dot(g, fw1_ref[...],
                          preferred_element_type=jnp.float32)
                  + fb1_ref[...]).astype(compute_dtype))      # (TB, 128)
    f = jnp.tanh(jnp.dot(f, fw2_ref[...],
                         preferred_element_type=jnp.float32)
                 + fb2_ref[...])                              # (TB, Kp) f32

    # ---- log_softmax over the lane-padded class dim (mask pad lanes first).
    lane = jax.lax.broadcasted_iota(jnp.int32, f.shape, 1)
    f = jnp.where(lane < k_classes, f, -jnp.inf)
    z = f - jnp.max(f, axis=-1, keepdims=True)
    lse = jnp.log(jnp.sum(jnp.exp(z), axis=-1, keepdims=True))
    out_ref[...] = (z - lse).astype(out_ref.dtype)            # (TB, Kp)


def _pick_tb(B, N_pad, itemsize):
    """Batch tile: sublane-aligned, target TB*N >= 1024 MXU rows, stay well
    inside VMEM (sized for v7x: 64 MiB physical / 32 MiB default-scoped), and
    keep >= 2 'parallel' grid steps (v7x has 2 TensorCores sharing them)."""
    n_lanes = ((N_pad + 127) // 128) * 128

    def vmem_bytes(tb):
        # double-buffered NCW input tile: 3 -> 8 sublanes, N -> n_lanes lanes, f32
        inp = 2 * tb * 8 * n_lanes * 4
        # peak activation slabs per row of the flattened (TB*N, C) view:
        # lane-padded (.,3) f32 transpose result + 64/128/256-wide activations
        # (+ one extra 256-wide slab for the max-subtracted copy)
        per_row = 128 * 4 + (64 + 128 + 256 + 256) * itemsize
        out = 2 * tb * 128 * 4
        return inp + tb * N_pad * per_row + out

    tb = max(8, ((pl.cdiv(1024, max(N_pad, 1)) + 7) // 8) * 8)
    budget = 20 << 20                       # ~20 MiB: ample headroom everywhere
    while tb > 8 and vmem_bytes(tb) > budget:
        tb -= 8
    while tb > 8 and pl.cdiv(B, tb) < 2:    # keep >= 2 parallel grid steps
        tb -= 8
    return tb


def make_params(key, k_classes):
    """Deterministic synthetic parameters (matmul layout: (in, out); bias (1, out))."""
    dims = [(3, 64), (64, 128), (128, 256), (256, 128), (128, k_classes)]
    params = []
    keys = jax.random.split(key, len(dims))
    for kk, (cin, cout) in zip(keys, dims):
        kw, kb = jax.random.split(kk)
        scale = 1.0 / jnp.sqrt(jnp.float32(cin))
        w = jax.random.normal(kw, (cin, cout), jnp.float32) * scale
        b = jax.random.normal(kb, (1, cout), jnp.float32) * scale
        params += [w, b]
    return tuple(params)


def pointset_cls(x_ncw, params, *, tb=None, compute_dtype=jnp.float32):
    """x_ncw: (B, 3, N) PyTorch NCW input. Returns (B, k) log-probabilities.

    compute_dtype: jnp.bfloat16 on v6e/v7x rides the bf16 VPU/EUP for the
    tanh-heavy layers (accumulation stays f32); keep jnp.float32 on v5e.
    """
    B, C, N = x_ncw.shape
    assert C == 3, "PointSetCls expects 3 input channels"
    w1, b1, w2, b2, w3, b3, fw1, fb1, fw2, fb2 = params
    k_classes = fw2.shape[1]
    kp = ((k_classes + 127) // 128) * 128
    cd = compute_dtype

    # Lane-dense output: pad the class dim of the last layer with zero columns;
    # the kernel masks them to -inf before log_softmax and we slice on the host.
    fw2p = jnp.pad(fw2, ((0, 0), (0, kp - k_classes)))
    fb2p = jnp.pad(fb2.reshape(1, -1), ((0, 0), (0, kp - k_classes)))

    # Pre-cast weights once on the host (they stay resident across grid steps;
    # casting inside the kernel would redo the convert every step). Biases stay
    # f32 (added after f32 accumulation).
    kparams = (w1.astype(cd), b1.reshape(1, -1).astype(jnp.float32),
               w2.astype(cd), b2.reshape(1, -1).astype(jnp.float32),
               w3.astype(cd), b3.reshape(1, -1).astype(jnp.float32),
               fw1.astype(cd), fb1.reshape(1, -1).astype(jnp.float32),
               fw2p.astype(cd), fb2p.astype(jnp.float32))

    # Pad points to a multiple of 16 by replicating the last point (max over
    # points and MaxPool1d are invariant to duplicated points) so the
    # (TB, N, C) <-> (TB*N, C) reshapes inside the kernel are free views.
    N_pad = max(16, ((N + 15) // 16) * 16)
    x = x_ncw.astype(jnp.float32)
    if N_pad != N:
        x = jnp.pad(x, ((0, 0), (0, 0), (0, N_pad - N)), mode="edge")

    itemsize = jnp.dtype(cd).itemsize
    if tb is None:
        tb = _pick_tb(B, N_pad, itemsize)
    B_pad = pl.cdiv(B, tb) * tb
    if B_pad != B:
        x = jnp.pad(x, ((0, B_pad - B), (0, 0), (0, 0)))
    grid = (B_pad // tb,)

    flops = (2 * B_pad * N_pad * (3 * 64 + 64 * 128 + 128 * 256)
             + 2 * B_pad * (256 * 128 + 128 * kp))
    transcendentals = B_pad * N_pad * (64 + 128 + 256) + B_pad * (128 + 2 * kp)
    bytes_accessed = (B_pad * 3 * N_pad * 4 + B_pad * kp * 4
                      + sum(int(p.size) * jnp.dtype(p.dtype).itemsize
                            for p in kparams))
    cost = pl.CostEstimate(flops=int(flops),
                           transcendentals=int(transcendentals),
                           bytes_accessed=int(bytes_accessed))

    out = pl.pallas_call(
        partial(pointset_cls_kernel, k_classes=k_classes, compute_dtype=cd),
        out_shape=jax.ShapeDtypeStruct((B_pad, kp), jnp.float32),
        grid=grid,
        in_specs=[pl.BlockSpec((tb, 3, N_pad), lambda b: (b, 0, 0))]
                 + [pl.BlockSpec(p.shape, lambda b: (0, 0)) for p in kparams],
        out_specs=pl.BlockSpec((tb, kp), lambda b: (b, 0)),
        compiler_params=pltpu.CompilerParams(
            dimension_semantics=("parallel",),
            vmem_limit_bytes=48 * 1024 * 1024),
        cost_estimate=cost,
    )(x, *kparams)
    return out[:B, :k_classes]


def _reference(x_ncw, params):
    """Pure-JAX reference of the PyTorch forward (dropout as identity)."""
    w1, b1, w2, b2, w3, b3, fw1, fb1, fw2, fb2 = params
    h = jnp.transpose(x_ncw, (0, 2, 1))                        # (B, N, 3)
    for w, b in ((w1, b1), (w2, b2), (w3, b3)):
        h = h - jnp.max(h, axis=1, keepdims=True)
        h = jnp.tanh(jnp.einsum('bnc,co->bno', h, w) + b)
    g = jnp.max(h, axis=1)                                     # (B, 256)
    f = jnp.tanh(g @ fw1 + fb1)
    f = jnp.tanh(f @ fw2 + fb2)
    return jax.nn.log_softmax(f, axis=-1)


if __name__ == "__main__":
    B = 16          # batch
    NUM_POINTS = 16
    K = 8           # number of classes

    key = jax.random.PRNGKey(0)
    kx, kparam = jax.random.split(key)
    x = jax.random.normal(kx, (B, 3, NUM_POINTS), jnp.float32)  # PyTorch NCW input
    params = make_params(kparam, K)

    # f32 path: exact check against the pure-JAX reference.
    logp = pointset_cls(x, params)
    jax.block_until_ready(logp)
    assert logp.shape == (B, K)
    assert bool(jnp.all(jnp.abs(jnp.sum(jnp.exp(logp), axis=-1) - 1.0) < 1e-4))
    ref = _reference(x, params)
    assert bool(jnp.max(jnp.abs(logp - ref)) < 1e-4)

    # bf16 compute path (v6e/v7x: bf16 VPU/EUP for the tanh-heavy layers,
    # f32 accumulation + f32 log_softmax). Loose sanity checks only.
    logp_bf16 = pointset_cls(x, params, compute_dtype=jnp.bfloat16)
    jax.block_until_ready(logp_bf16)
    assert logp_bf16.shape == (B, K)
    assert bool(jnp.all(jnp.isfinite(logp_bf16)))
    assert bool(jnp.all(jnp.abs(jnp.sum(jnp.exp(logp_bf16), axis=-1) - 1.0) < 1e-2))

    print("KERNEL_OK")
</pallas_src>

<mosaic_0001>
module attributes {stable_mosaic.version = 11 : i64} {
  func.func @pointset_cls_kernel(%arg0: i32, %arg1: memref<8x3x16xf32, #tpu.memory_space<vmem>>, %arg2: memref<3x64xf32, #tpu.memory_space<vmem>>, %arg3: memref<1x64xf32, #tpu.memory_space<vmem>>, %arg4: memref<64x128xf32, #tpu.memory_space<vmem>>, %arg5: memref<1x128xf32, #tpu.memory_space<vmem>>, %arg6: memref<128x256xf32, #tpu.memory_space<vmem>>, %arg7: memref<1x256xf32, #tpu.memory_space<vmem>>, %arg8: memref<256x128xf32, #tpu.memory_space<vmem>>, %arg9: memref<1x128xf32, #tpu.memory_space<vmem>>, %arg10: memref<128x128xf32, #tpu.memory_space<vmem>>, %arg11: memref<1x128xf32, #tpu.memory_space<vmem>>, %arg12: memref<8x128xf32, #tpu.memory_space<vmem>>) attributes {dimension_semantics = [#tpu.dimension_semantics<parallel>], iteration_bounds = array<i64: 2>, scalar_prefetch = 0 : i64, scratch_operands = 0 : i64, tpu.core_type = #tpu.core_type<tc>, window_params = [{transform_indices = @transform_0, window_bounds = array<i64: 8, 3, 16>}, {pipeline_mode = #tpu.pipeline_mode<synchronous>, transform_indices = @transform_1, window_bounds = array<i64: 3, 64>}, {pipeline_mode = #tpu.pipeline_mode<synchronous>, transform_indices = @transform_2, window_bounds = array<i64: 1, 64>}, {pipeline_mode = #tpu.pipeline_mode<synchronous>, transform_indices = @transform_3, window_bounds = array<i64: 64, 128>}, {pipeline_mode = #tpu.pipeline_mode<synchronous>, transform_indices = @transform_4, window_bounds = array<i64: 1, 128>}, {pipeline_mode = #tpu.pipeline_mode<synchronous>, transform_indices = @transform_5, window_bounds = array<i64: 128, 256>}, {pipeline_mode = #tpu.pipeline_mode<synchronous>, transform_indices = @transform_6, window_bounds = array<i64: 1, 256>}, {pipeline_mode = #tpu.pipeline_mode<synchronous>, transform_indices = @transform_7, window_bounds = array<i64: 256, 128>}, {pipeline_mode = #tpu.pipeline_mode<synchronous>, transform_indices = @transform_8, window_bounds = array<i64: 1, 128>}, {pipeline_mode = #tpu.pipeline_mode<synchronous>, transform_indices = @transform_9, window_bounds = array<i64: 128, 128>}, {pipeline_mode = #tpu.pipeline_mode<synchronous>, transform_indices = @transform_10, window_bounds = array<i64: 1, 128>}, {transform_indices = @transform_11, window_bounds = array<i64: 8, 128>}]} {
    %c0 = arith.constant 0 : index
    %c0_0 = arith.constant 0 : index
    %c0_1 = arith.constant 0 : index
    %0 = vector.load %arg1[%c0, %c0_0, %c0_1] : memref<8x3x16xf32, #tpu.memory_space<vmem>>, vector<8x3x16xf32>
    %cst = arith.constant dense<0xFF800000> : vector<8x3xf32>
    %1 = vector.multi_reduction <maximumf>, %0, %cst [2] : vector<8x3x16xf32> to vector<8x3xf32>
    %2 = vector.shape_cast %1 : vector<8x3xf32> to vector<8x3x1xf32>
    %3 = vector.broadcast %2 : vector<8x3x1xf32> to vector<8x3x16xf32>
    %4 = arith.subf %0, %3 : vector<8x3x16xf32>
    %5 = tpu.transpose %4, [0, 2, 1] : vector<8x3x16xf32> -> vector<8x16x3xf32>
    %6 = vector.shape_cast %5 : vector<8x16x3xf32> to vector<128x3xf32>
    %c0_2 = arith.constant 0 : index
    %c0_3 = arith.constant 0 : index
    %7 = vector.load %arg2[%c0_2, %c0_3] : memref<3x64xf32, #tpu.memory_space<vmem>>, vector<3x64xf32>
    %cst_4 = arith.constant dense<0.000000e+00> : vector<128x64xf32>
    %8 = tpu.matmul %6, %7, %cst_4 {dimension_numbers = #tpu.dot_dimension_numbers<[1], [0], [0], [1], [0, 0, 1, 1], [], []>} : vector<128x3xf32>, vector<3x64xf32>, vector<128x64xf32> -> vector<128x64xf32>
    %c0_5 = arith.constant 0 : index
    %c0_6 = arith.constant 0 : index
    %9 = vector.load %arg3[%c0_5, %c0_6] : memref<1x64xf32, #tpu.memory_space<vmem>>, vector<1x64xf32>
    %10 = vector.broadcast %9 : vector<1x64xf32> to vector<128x64xf32>
    %11 = arith.addf %8, %10 : vector<128x64xf32>
    %12 = math.tanh %11 : vector<128x64xf32>
    %13 = vector.shape_cast %12 : vector<128x64xf32> to vector<8x16x64xf32>
    %cst_7 = arith.constant dense<0xFF800000> : vector<8x64xf32>
    %14 = vector.multi_reduction <maximumf>, %13, %cst_7 [1] : vector<8x16x64xf32> to vector<8x64xf32>
    %15 = vector.shape_cast %14 : vector<8x64xf32> to vector<8x1x64xf32>
    %16 = vector.broadcast %15 : vector<8x1x64xf32> to vector<8x16x64xf32>
    %17 = arith.subf %13, %16 : vector<8x16x64xf32>
    %18 = vector.shape_cast %17 : vector<8x16x64xf32> to vector<128x64xf32>
    %c0_8 = arith.constant 0 : index
    %c0_9 = arith.constant 0 : index
    %19 = vector.load %arg4[%c0_8, %c0_9] : memref<64x128xf32, #tpu.memory_space<vmem>>, vector<64x128xf32>
    %cst_10 = arith.constant dense<0.000000e+00> : vector<128x128xf32>
    %20 = tpu.matmul %18, %19, %cst_10 {dimension_numbers = #tpu.dot_dimension_numbers<[1], [0], [0], [1], [0, 0, 1, 1], [], []>} : vector<128x64xf32>, vector<64x128xf32>, vector<128x128xf32> -> vector<128x128xf32>
    %c0_11 = arith.constant 0 : index
    %c0_12 = arith.constant 0 : index
    %21 = vector.load %arg5[%c0_11, %c0_12] : memref<1x128xf32, #tpu.memory_space<vmem>>, vector<1x128xf32>
    %22 = vector.broadcast %21 : vector<1x128xf32> to vector<128x128xf32>
    %23 = arith.addf %20, %22 : vector<128x128xf32>
    %24 = math.tanh %23 : vector<128x128xf32>
    %25 = vector.shape_cast %24 : vector<128x128xf32> to vector<8x16x128xf32>
    %cst_13 = arith.constant dense<0xFF800000> : vector<8x128xf32>
    %26 = vector.multi_reduction <maximumf>, %25, %cst_13 [1] : vector<8x16x128xf32> to vector<8x128xf32>
    %27 = vector.shape_cast %26 : vector<8x128xf32> to vector<8x1x128xf32>
    %28 = vector.broadcast %27 : vector<8x1x128xf32> to vector<8x16x128xf32>
    %29 = arith.subf %25, %28 : vector<8x16x128xf32>
    %30 = vector.shape_cast %29 : vector<8x16x128xf32> to vector<128x128xf32>
    %c0_14 = arith.constant 0 : index
    %c0_15 = arith.constant 0 : index
    %31 = vector.load %arg6[%c0_14, %c0_15] : memref<128x256xf32, #tpu.memory_space<vmem>>, vector<128x256xf32>
    %cst_16 = arith.constant dense<0.000000e+00> : vector<128x256xf32>
    %32 = tpu.matmul %30, %31, %cst_16 {dimension_numbers = #tpu.dot_dimension_numbers<[1], [0], [0], [1], [0, 0, 1, 1], [], []>} : vector<128x128xf32>, vector<128x256xf32>, vector<128x256xf32> -> vector<128x256xf32>
    %c0_17 = arith.constant 0 : index
    %c0_18 = arith.constant 0 : index
    %33 = vector.load %arg7[%c0_17, %c0_18] : memref<1x256xf32, #tpu.memory_space<vmem>>, vector<1x256xf32>
    %34 = vector.broadcast %33 : vector<1x256xf32> to vector<128x256xf32>
    %35 = arith.addf %32, %34 : vector<128x256xf32>
    %36 = math.tanh %35 : vector<128x256xf32>
    %37 = vector.shape_cast %36 : vector<128x256xf32> to vector<8x16x256xf32>
    %cst_19 = arith.constant dense<0xFF800000> : vector<8x256xf32>
    %38 = vector.multi_reduction <maximumf>, %37, %cst_19 [1] : vector<8x16x256xf32> to vector<8x256xf32>
    %c0_20 = arith.constant 0 : index
    %c0_21 = arith.constant 0 : index
    %39 = vector.load %arg8[%c0_20, %c0_21] : memref<256x128xf32, #tpu.memory_space<vmem>>, vector<256x128xf32>
    %cst_22 = arith.constant dense<0.000000e+00> : vector<8x128xf32>
    %40 = tpu.matmul %38, %39, %cst_22 {dimension_numbers = #tpu.dot_dimension_numbers<[1], [0], [0], [1], [0, 0, 1, 1], [], []>} : vector<8x256xf32>, vector<256x128xf32>, vector<8x128xf32> -> vector<8x128xf32>
    %c0_23 = arith.constant 0 : index
    %c0_24 = arith.constant 0 : index
    %41 = vector.load %arg9[%c0_23, %c0_24] : memref<1x128xf32, #tpu.memory_space<vmem>>, vector<1x128xf32>
    %42 = vector.broadcast %41 : vector<1x128xf32> to vector<8x128xf32>
    %43 = arith.addf %40, %42 : vector<8x128xf32>
    %44 = math.tanh %43 : vector<8x128xf32>
    %c0_25 = arith.constant 0 : index
    %c0_26 = arith.constant 0 : index
    %45 = vector.load %arg10[%c0_25, %c0_26] : memref<128x128xf32, #tpu.memory_space<vmem>>, vector<128x128xf32>
    %cst_27 = arith.constant dense<0.000000e+00> : vector<8x128xf32>
    %46 = tpu.matmul %44, %45, %cst_27 {dimension_numbers = #tpu.dot_dimension_numbers<[1], [0], [0], [1], [0, 0, 1, 1], [], []>} : vector<8x128xf32>, vector<128x128xf32>, vector<8x128xf32> -> vector<8x128xf32>
    %c0_28 = arith.constant 0 : index
    %c0_29 = arith.constant 0 : index
    %47 = vector.load %arg11[%c0_28, %c0_29] : memref<1x128xf32, #tpu.memory_space<vmem>>, vector<1x128xf32>
    %48 = vector.broadcast %47 : vector<1x128xf32> to vector<8x128xf32>
    %49 = arith.addf %46, %48 : vector<8x128xf32>
    %50 = math.tanh %49 : vector<8x128xf32>
    %51 = tpu.iota {dimensions = array<i32: 1>} : vector<8x128xi32>
    %c8_i32 = arith.constant 8 : i32
    %52 = vector.broadcast %c8_i32 : i32 to vector<8x128xi32>
    %53 = arith.cmpi slt, %51, %52 : vector<8x128xi32>
    %cst_30 = arith.constant 0xFF800000 : f32
    %54 = vector.broadcast %cst_30 : f32 to vector<8x128xf32>
    %55 = arith.select %53, %50, %54 : vector<8x128xi1>, vector<8x128xf32>
    %cst_31 = arith.constant dense<0xFF800000> : vector<8xf32>
    %56 = vector.multi_reduction <maximumf>, %55, %cst_31 [1] : vector<8x128xf32> to vector<8xf32>
    %57 = vector.shape_cast %56 : vector<8xf32> to vector<8x1xf32>
    %58 = vector.broadcast %57 : vector<8x1xf32> to vector<8x128xf32>
    %59 = arith.subf %55, %58 : vector<8x128xf32>
    %60 = math.exp %59 : vector<8x128xf32>
    %cst_32 = arith.constant dense<0.000000e+00> : vector<8xf32>
    %61 = vector.multi_reduction <add>, %60, %cst_32 [1] : vector<8x128xf32> to vector<8xf32>
    %62 = vector.shape_cast %61 : vector<8xf32> to vector<8x1xf32>
    %63 = math.log %62 : vector<8x1xf32>
    %64 = vector.broadcast %63 : vector<8x1xf32> to vector<8x128xf32>
    %65 = arith.subf %59, %64 : vector<8x128xf32>
    %c0_33 = arith.constant 0 : index
    %c0_34 = arith.constant 0 : index
    %66 = vector.load %arg12[%c0_33, %c0_34] : memref<8x128xf32, #tpu.memory_space<vmem>>, vector<8x128xf32>
    tpu.vector_store %arg12[%c0_33, %c0_34], %65 {strides = array<i32>} : memref<8x128xf32, #tpu.memory_space<vmem>>, vector<8x128xf32>,
    return
  }
  func.func @transform_0(%arg0: i32) -> (i32, i32, i32) {
    %c0_i32 = arith.constant 0 : i32
    %c0_i32_0 = arith.constant 0 : i32
    %c0_i32_1 = arith.constant 0 : i32
    return %arg0, %c0_i32, %c0_i32_0 : i32, i32, i32
  }
  func.func @transform_1(%arg0: i32) -> (i32, i32) {
    %c0_i32 = arith.constant 0 : i32
    %c0_i32_0 = arith.constant 0 : i32
    %c0_i32_1 = arith.constant 0 : i32
    return %c0_i32, %c0_i32_0 : i32, i32
  }
  func.func @transform_2(%arg0: i32) -> (i32, i32) {
    %c0_i32 = arith.constant 0 : i32
    %c0_i32_0 = arith.constant 0 : i32
    %c0_i32_1 = arith.constant 0 : i32
    return %c0_i32, %c0_i32_0 : i32, i32
  }
  func.func @transform_3(%arg0: i32) -> (i32, i32) {
    %c0_i32 = arith.constant 0 : i32
    %c0_i32_0 = arith.constant 0 : i32
    %c0_i32_1 = arith.constant 0 : i32
    return %c0_i32, %c0_i32_0 : i32, i32
  }
  func.func @transform_4(%arg0: i32) -> (i32, i32) {
    %c0_i32 = arith.constant 0 : i32
    %c0_i32_0 = arith.constant 0 : i32
    %c0_i32_1 = arith.constant 0 : i32
    return %c0_i32, %c0_i32_0 : i32, i32
  }
  func.func @transform_5(%arg0: i32) -> (i32, i32) {
    %c0_i32 = arith.constant 0 : i32
    %c0_i32_0 = arith.constant 0 : i32
    %c0_i32_1 = arith.constant 0 : i32
    return %c0_i32, %c0_i32_0 : i32, i32
  }
  func.func @transform_6(%arg0: i32) -> (i32, i32) {
    %c0_i32 = arith.constant 0 : i32
    %c0_i32_0 = arith.constant 0 : i32
    %c0_i32_1 = arith.constant 0 : i32
    return %c0_i32, %c0_i32_0 : i32, i32
  }
  func.func @transform_7(%arg0: i32) -> (i32, i32) {
    %c0_i32 = arith.constant 0 : i32
    %c0_i32_0 = arith.constant 0 : i32
    %c0_i32_1 = arith.constant 0 : i32
    return %c0_i32, %c0_i32_0 : i32, i32
  }
  func.func @transform_8(%arg0: i32) -> (i32, i32) {
    %c0_i32 = arith.constant 0 : i32
    %c0_i32_0 = arith.constant 0 : i32
    %c0_i32_1 = arith.constant 0 : i32
    return %c0_i32, %c0_i32_0 : i32, i32
  }
  func.func @transform_9(%arg0: i32) -> (i32, i32) {
    %c0_i32 = arith.constant 0 : i32
    %c0_i32_0 = arith.constant 0 : i32
    %c0_i32_1 = arith.constant 0 : i32
    return %c0_i32, %c0_i32_0 : i32, i32
  }
  func.func @transform_10(%arg0: i32) -> (i32, i32) {
    %c0_i32 = arith.constant 0 : i32
    %c0_i32_0 = arith.constant 0 : i32
    %c0_i32_1 = arith.constant 0 : i32
    return %c0_i32, %c0_i32_0 : i32, i32
  }
  func.func @transform_11(%arg0: i32) -> (i32, i32) {
    %c0_i32 = arith.constant 0 : i32
    %c0_i32_0 = arith.constant 0 : i32
    return %arg0, %c0_i32 : i32, i32
  }
}

</mosaic_0001>

<llo_original>
// kernel: tpu_custom_call.1
$region0: #{tpu_custom_call.1}
  #allocation0 [shape = 'u32[]', space=smem, size = 0x4, offset = 0x4, fixed_abs, tag = 'smem constant byte address 0x4 - core index']
  #allocation1 [shape = 'u32[144,128]{1,0:T(1,128)}', space=vmem, size = 0x12000, scoped, tag = 'internal scratch']
  %s0 = inlined_call_operand.vmem [shape: f32[16,3,16], index: 0, kind: input, shape index: {}]
  %s1 = inlined_call_operand.hbm [shape: f32[3,64], index: 1, kind: input, shape index: {}]
  %s2 = inlined_call_operand.hbm [shape: f32[1,64], index: 2, kind: input, shape index: {}]
  %s3 = inlined_call_operand.hbm [shape: f32[64,128], index: 3, kind: input, shape index: {}]
  %s4 = inlined_call_operand.hbm [shape: f32[1,128], index: 4, kind: input, shape index: {}]
  %s5 = inlined_call_operand.hbm [shape: f32[128,256], index: 5, kind: input, shape index: {}]
  %s6 = inlined_call_operand.hbm [shape: f32[1,256], index: 6, kind: input, shape index: {}]
  %s7 = inlined_call_operand.hbm [shape: f32[256,128], index: 7, kind: input, shape index: {}]
  %s8 = inlined_call_operand.hbm [shape: f32[1,128], index: 8, kind: input, shape index: {}]
  %s9 = inlined_call_operand.vmem [shape: f32[128,128], index: 9, kind: input, shape index: {}]
  %s10 = inlined_call_operand.vmem [shape: f32[1,128], index: 10, kind: input, shape index: {}]
  %s11 = inlined_call_operand.hbm [shape: f32[16,128], index: 11, kind: output, shape index: {}]
  %s12 = sld [smem:[#allocation0]]
  $region109: #{tpu_custom_call.1} parent=0
    _
  %s14 = ssub.s32 1, %s12
  %s15 = scalar_select 0, %s14, %s12
  $region1: #{tpu_custom_call.1} parent=0
    #allocation2 [shape = 'u8[2048]{0}', space=vmem, size = 0x800, scoped, tag = 'input window, operand 1, single buffered']
    #allocation3 [shape = 's32[2]{0}', space=sflag, size = 0x8, scoped, tag = 'scoped memory for tpu_custom_call.1']
    #allocation4 [shape = 's32[2]{0}', space=sflag, size = 0x8, scoped, tag = 'scoped memory for tpu_custom_call.1']
    #allocation5 [shape = 'u8[512]{0}', space=vmem, size = 0x400, scoped, tag = 'input window, operand 2, single buffered']
    #allocation6 [shape = 's32[1]{0}', space=sflag, size = 0x4, scoped, tag = 'scoped memory for tpu_custom_call.1']
    #allocation7 [shape = 'u8[32768]{0}', space=vmem, size = 0x8000, scoped, tag = 'input window, operand 3, single buffered']
    #allocation8 [shape = 'u8[512]{0}', space=vmem, size = 0x400, scoped, tag = 'input window, operand 4, single buffered']
    #allocation9 [shape = 's32[1]{0}', space=sflag, size = 0x4, scoped, tag = 'scoped memory for tpu_custom_call.1']
    #allocation10 [shape = 'u8[131072]{0}', space=vmem, size = 0x20000, scoped, tag = 'input window, operand 5, single buffered']
    #allocation11 [shape = 'u8[1024]{0}', space=vmem, size = 0x400, scoped, tag = 'input window, operand 6, single buffered']
    #allocation12 [shape = 's32[1]{0}', space=sflag, size = 0x4, scoped, tag = 'scoped memory for tpu_custom_call.1']
    #allocation13 [shape = 'u8[131072]{0}', space=vmem, size = 0x20000, scoped, tag = 'input window, operand 7, single buffered']
    #allocation14 [shape = 'u8[512]{0}', space=vmem, size = 0x400, scoped, tag = 'input window, operand 8, single buffered']
    #allocation15 [shape = 's32[1]{0}', space=sflag, size = 0x4, scoped, tag = 'scoped memory for tpu_custom_call.1']
    #allocation16 [shape = 'u8[8192]{0}', space=vmem, size = 0x2000, scoped, tag = 'output window, operand 0']
    %16 = vsyncpa [#allocation3], 0
    %17 = vsyncpa [#allocation6], 0
    %18 = vsyncpa [#allocation9], 0
    %19 = vsyncpa [#allocation12], 0
    %20 = vsyncpa [#allocation15], 0
    %21 = vsyncpa [#allocation4], 0
    %s22 = scalar_lea.sflag [#allocation4], 1
    %23 = vsyncpa %s22, 0
    loop: start=0, step=1, limit=4
    $region2: #{tpu_custom_call.1} parent=1 // loop_pre_header
      _
    $region3: #{tpu_custom_call.1} parent=1 // loop_header
      %s25 = sphi 0, %s29
      %p26 = scmp.ge.s32.totalorder %s25, 4
      %s35 = sphi 0, %s37
      %s38 = sphi 0, %s35
      %s39 = sphi 0, %s38
      %s55 = sphi 0, %s39
      %s59 = sphi 0, %s59
      %s61 = sphi 0, %s59
      %s62 = sphi 0, %s61
      %s76 = sphi 0, %s62
      %s80 = sphi 0, %s80
      %s82 = sphi 0, %s80
      %s83 = sphi 0, %s82
      %s97 = sphi 0, %s83
      %s101 = sphi 0, %s101
      %s103 = sphi 0, %s101
      %s104 = sphi 0, %s103
      %s118 = sphi 0, %s104
      %s122 = sphi 0, %s122
      %s124 = sphi 0, %s122
      %s125 = sphi 0, %s124
      %s139 = sphi 0, %s125
      %s143 = sphi 0, %s143
      %s145 = sphi 0, %s143
      %s146 = sphi 0, %s145
      %s160 = sphi 0, %s146
      %s164 = sphi 0, %s164
      %s166 = sphi 0, %s164
      %s167 = sphi 0, %s166
      %s181 = sphi 0, %s167
      %s185 = sphi 0, %s185
      %s187 = sphi 0, %s185
      %s188 = sphi 0, %s187
      %s202 = sphi 0, %s188
      %s206 = sphi 0, %s206
      %s208 = sphi 0, %s206
      %s209 = sphi 0, %s208
      %s223 = sphi 0, %s209
      %s227 = sphi 0, %s227
      %s229 = sphi 0, %s227
      %s230 = sphi 0, %s229
      %s244 = sphi 0, %s230
      %s248 = sphi 0, %s248
      %s250 = sphi 0, %s248
      %s251 = sphi 0, %s250
      %s265 = sphi 0, %s251
      %s271 = sphi 0, %s273
      %s274 = sphi 0, %s271
      %s275 = sphi 0, %s274
      %s291 = sphi 0, %s275
    $region4: #{tpu_custom_call.1} parent=1 // loop_header_branch
      %28 = sbr.rel (%p26) target = $region8
    $region5: #{tpu_custom_call.1} parent=1 // loop_body
      %s30 = ssub.s32 %s25, 1
      %s31 = ssub.s32 %s25, 2
      %s32 = sadd.s32 %s25, 1
      %s33 = ssub.s32 %s25, %s32
      %p34 = scmp.eq.s32.totalorder %s33, 0
      %s36 = sadd.s32 %s35, 1
      %s37 = scalar_select %p34, %s35, %s36
      %p40 = pneg %p34
      %p41 = scmp.eq.s32.totalorder %s25, 1
      %p42 = por %p40, %p41
      %p43 = scmp.ne.s32.totalorder %s35, %s38
      %p44 = scmp.eq.s32.totalorder %s25, 0
      %p45 = por %p43, %p44
      %p46 = scmp.ne.s32.totalorder %s35, %s38
      %p47 = scmp.eq.s32.totalorder %s30, 1
      %p48 = por %p46, %p47
      %p49 = scmp.ne.s32.totalorder %s38, %s39
      %p50 = scmp.eq.s32.totalorder %s30, 0
      %p51 = por %p49, %p50
      %p52 = scmp.ne.s32.totalorder %s38, %s39
      %p53 = scmp.eq.s32.totalorder %s31, 1
      %p54 = por %p52, %p53
      %p56 = scmp.ne.s32.totalorder %s39, %s55
      %p57 = scmp.eq.s32.totalorder %s31, 0
      %p58 = por %p56, %p57
      %s60 = sadd.s32 %s59, 1
      %p63 = scmp.eq.s32.totalorder %s25, 1
      %p64 = scmp.ne.s32.totalorder %s59, %s61
      %p65 = scmp.eq.s32.totalorder %s25, 0
      %p66 = por %p64, %p65
      %p67 = scmp.ne.s32.totalorder %s59, %s61
      %p68 = scmp.eq.s32.totalorder %s30, 1
      %p69 = por %p67, %p68
      %p70 = scmp.ne.s32.totalorder %s61, %s62
      %p71 = scmp.eq.s32.totalorder %s30, 0
      %p72 = por %p70, %p71
      %p73 = scmp.ne.s32.totalorder %s61, %s62
      %p74 = scmp.eq.s32.totalorder %s31, 1
      %p75 = por %p73, %p74
      %p77 = scmp.ne.s32.totalorder %s62, %s76
      %p78 = scmp.eq.s32.totalorder %s31, 0
      %p79 = por %p77, %p78
      %s81 = sadd.s32 %s80, 1
      %p84 = scmp.eq.s32.totalorder %s25, 1
      %p85 = scmp.ne.s32.totalorder %s80, %s82
      %p86 = scmp.eq.s32.totalorder %s25, 0
      %p87 = por %p85, %p86
      %p88 = scmp.ne.s32.totalorder %s80, %s82
      %p89 = scmp.eq.s32.totalorder %s30, 1
      %p90 = por %p88, %p89
      %p91 = scmp.ne.s32.totalorder %s82, %s83
      %p92 = scmp.eq.s32.totalorder %s30, 0
      %p93 = por %p91, %p92
      %p94 = scmp.ne.s32.totalorder %s82, %s83
      %p95 = scmp.eq.s32.totalorder %s31, 1
      %p96 = por %p94, %p95
      %p98 = scmp.ne.s32.totalorder %s83, %s97
      %p99 = scmp.eq.s32.totalorder %s31, 0
      %p100 = por %p98, %p99
      %s102 = sadd.s32 %s101, 1
      %p105 = scmp.eq.s32.totalorder %s25, 1
      %p106 = scmp.ne.s32.totalorder %s101, %s103
      %p107 = scmp.eq.s32.totalorder %s25, 0
      %p108 = por %p106, %p107
      %p109 = scmp.ne.s32.totalorder %s101, %s103
      %p110 = scmp.eq.s32.totalorder %s30, 1
      %p111 = por %p109, %p110
      %p112 = scmp.ne.s32.totalorder %s103, %s104
      %p113 = scmp.eq.s32.totalorder %s30, 0
      %p114 = por %p112, %p113
      %p115 = scmp.ne.s32.totalorder %s103, %s104
      %p116 = scmp.eq.s32.totalorder %s31, 1
      %p117 = por %p115, %p116
      %p119 = scmp.ne.s32.totalorder %s104, %s118
      %p120 = scmp.eq.s32.totalorder %s31, 0
      %p121 = por %p119, %p120
      %s123 = sadd.s32 %s122, 1
      %p126 = scmp.eq.s32.totalorder %s25, 1
      %p127 = scmp.ne.s32.totalorder %s122, %s124
      %p128 = scmp.eq.s32.totalorder %s25, 0
      %p129 = por %p127, %p128
      %p130 = scmp.ne.s32.totalorder %s122, %s124
      %p131 = scmp.eq.s32.totalorder %s30, 1
      %p132 = por %p130, %p131
      %p133 = scmp.ne.s32.totalorder %s124, %s125
      %p134 = scmp.eq.s32.totalorder %s30, 0
      %p135 = por %p133, %p134
      %p136 = scmp.ne.s32.totalorder %s124, %s125
      %p137 = scmp.eq.s32.totalorder %s31, 1
      %p138 = por %p136, %p137
      %p140 = scmp.ne.s32.totalorder %s125, %s139
      %p141 = scmp.eq.s32.totalorder %s31, 0
      %p142 = por %p140, %p141
      %s144 = sadd.s32 %s143, 1
      %p147 = scmp.eq.s32.totalorder %s25, 1
      %p148 = scmp.ne.s32.totalorder %s143, %s145
      %p149 = scmp.eq.s32.totalorder %s25, 0
      %p150 = por %p148, %p149
      %p151 = scmp.ne.s32.totalorder %s143, %s145
      %p152 = scmp.eq.s32.totalorder %s30, 1
      %p153 = por %p151, %p152
      %p154 = scmp.ne.s32.totalorder %s145, %s146
      %p155 = scmp.eq.s32.totalorder %s30, 0
      %p156 = por %p154, %p155
      %p157 = scmp.ne.s32.totalorder %s145, %s146
      %p158 = scmp.eq.s32.totalorder %s31, 1
      %p159 = por %p157, %p158
      %p161 = scmp.ne.s32.totalorder %s146, %s160
      %p162 = scmp.eq.s32.totalorder %s31, 0
      %p163 = por %p161, %p162
      %s165 = sadd.s32 %s164, 1
      %p168 = scmp.eq.s32.totalorder %s25, 1
      %p169 = scmp.ne.s32.totalorder %s164, %s166
      %p170 = scmp.eq.s32.totalorder %s25, 0
      %p171 = por %p169, %p170
      %p172 = scmp.ne.s32.totalorder %s164, %s166
      %p173 = scmp.eq.s32.totalorder %s30, 1
      %p174 = por %p172, %p173
      %p175 = scmp.ne.s32.totalorder %s166, %s167
      %p176 = scmp.eq.s32.totalorder %s30, 0
      %p177 = por %p175, %p176
      %p178 = scmp.ne.s32.totalorder %s166, %s167
      %p179 = scmp.eq.s32.totalorder %s31, 1
      %p180 = por %p178, %p179
      %p182 = scmp.ne.s32.totalorder %s167, %s181
      %p183 = scmp.eq.s32.totalorder %s31, 0
      %p184 = por %p182, %p183
      %s186 = sadd.s32 %s185, 1
      %p189 = scmp.eq.s32.totalorder %s25, 1
      %p190 = scmp.ne.s32.totalorder %s185, %s187
      %p191 = scmp.eq.s32.totalorder %s25, 0
      %p192 = por %p190, %p191
      %p193 = scmp.ne.s32.totalorder %s185, %s187
      %p194 = scmp.eq.s32.totalorder %s30, 1
      %p195 = por %p193, %p194
      %p196 = scmp.ne.s32.totalorder %s187, %s188
      %p197 = scmp.eq.s32.totalorder %s30, 0
      %p198 = por %p196, %p197
      %p199 = scmp.ne.s32.totalorder %s187, %s188
      %p200 = scmp.eq.s32.totalorder %s31, 1
      %p201 = por %p199, %p200
      %p203 = scmp.ne.s32.totalorder %s188, %s202
      %p204 = scmp.eq.s32.totalorder %s31, 0
      %p205 = por %p203, %p204
      %s207 = sadd.s32 %s206, 1
      %p210 = scmp.eq.s32.totalorder %s25, 1
      %p211 = scmp.ne.s32.totalorder %s206, %s208
      %p212 = scmp.eq.s32.totalorder %s25, 0
      %p213 = por %p211, %p212
      %p214 = scmp.ne.s32.totalorder %s206, %s208
      %p215 = scmp.eq.s32.totalorder %s30, 1
      %p216 = por %p214, %p215
      %p217 = scmp.ne.s32.totalorder %s208, %s209
      %p218 = scmp.eq.s32.totalorder %s30, 0
      %p219 = por %p217, %p218
      %p220 = scmp.ne.s32.totalorder %s208, %s209
      %p221 = scmp.eq.s32.totalorder %s31, 1
      %p222 = por %p220, %p221
      %p224 = scmp.ne.s32.totalorder %s209, %s223
      %p225 = scmp.eq.s32.totalorder %s31, 0
      %p226 = por %p224, %p225
      %s228 = sadd.s32 %s227, 1
      %p231 = scmp.eq.s32.totalorder %s25, 1
      %p232 = scmp.ne.s32.totalorder %s227, %s229
      %p233 = scmp.eq.s32.totalorder %s25, 0
      %p234 = por %p232, %p233
      %p235 = scmp.ne.s32.totalorder %s227, %s229
      %p236 = scmp.eq.s32.totalorder %s30, 1
      %p237 = por %p235, %p236
      %p238 = scmp.ne.s32.totalorder %s229, %s230
      %p239 = scmp.eq.s32.totalorder %s30, 0
      %p240 = por %p238, %p239
      %p241 = scmp.ne.s32.totalorder %s229, %s230
      %p242 = scmp.eq.s32.totalorder %s31, 1
      %p243 = por %p241, %p242
      %p245 = scmp.ne.s32.totalorder %s230, %s244
      %p246 = scmp.eq.s32.totalorder %s31, 0
      %p247 = por %p245, %p246
      %s249 = sadd.s32 %s248, 1
      %p252 = scmp.eq.s32.totalorder %s25, 1
      %p253 = scmp.ne.s32.totalorder %s248, %s250
      %p254 = scmp.eq.s32.totalorder %s25, 0
      %p255 = por %p253, %p254
      %p256 = scmp.ne.s32.totalorder %s248, %s250
      %p257 = scmp.eq.s32.totalorder %s30, 1
      %p258 = por %p256, %p257
      %p259 = scmp.ne.s32.totalorder %s250, %s251
      %p260 = scmp.eq.s32.totalorder %s30, 0
      %p261 = por %p259, %p260
      %p262 = scmp.ne.s32.totalorder %s250, %s251
      %p263 = scmp.eq.s32.totalorder %s31, 1
      %p264 = por %p262, %p263
      %p266 = scmp.ne.s32.totalorder %s251, %s265
      %p267 = scmp.eq.s32.totalorder %s31, 0
      %p268 = por %p266, %p267
      %s269 = ssub.s32 %s25, %s32
      %p270 = scmp.eq.s32.totalorder %s269, 0
      %s272 = sadd.s32 %s271, 1
      %s273 = scalar_select %p270, %s271, %s272
      %p276 = pneg %p270
      %p277 = scmp.eq.s32.totalorder %s25, 1
      %p278 = por %p276, %p277
      %p279 = scmp.ne.s32.totalorder %s271, %s274
      %p280 = scmp.eq.s32.totalorder %s25, 0
      %p281 = por %p279, %p280
      %p282 = scmp.ne.s32.totalorder %s271, %s274
      %p283 = scmp.eq.s32.totalorder %s30, 1
      %p284 = por %p282, %p283
      %p285 = scmp.ne.s32.totalorder %s274, %s275
      %p286 = scmp.eq.s32.totalorder %s30, 0
      %p287 = por %p285, %p286
      %p288 = scmp.ne.s32.totalorder %s274, %s275
      %p289 = scmp.eq.s32.totalorder %s31, 1
      %p290 = por %p288, %p289
      %p292 = scmp.ne.s32.totalorder %s275, %s291
      %p293 = scmp.eq.s32.totalorder %s31, 0
      %p294 = por %p292, %p293
      %p295 = scmp.le.s32.totalorder 1, %s25
      %p296 = scmp.lt.s32.totalorder %s25, 3
      %p297 = pnand %p295, %p296
      %p298 = pneg %p297
      // Predicated region
      $region9: #{tpu_custom_call.1} parent=5 // pred_check
        _
      $region10: #{tpu_custom_call.1} parent=5 // pred_check_branch
        %300 = sbr.rel (%p297) target = $region12
      $region11: #{tpu_custom_call.1} parent=5 // pred_region
        %s301 = ssub.s32 %s25, 1
        // Predicated region
        $region13: #{tpu_custom_call.1} parent=11 // pred_check
          %p302 = pneg %p72
        $region14: #{tpu_custom_call.1} parent=11 // pred_check_branch
          %304 = sbr.rel (%p302) target = $region16
        $region15: #{tpu_custom_call.1} parent=11 // pred_region
          %s306 = ssub.s32 64, 64
          %307 = vsyncadd [#allocation3], %s306
          %s309 = sshll.u32 [#allocation2], 4
          %s310 = int_to_ptr.vmem [resolvable:$true] %s309
          %312 = dma.hbm_to_vmem [thread:$0]  %s1, 64, %s310, [#allocation3]
        $region16: #{tpu_custom_call.1} parent=11 // pred_fallthru
          _
        // Predicated region
        $region17: #{tpu_custom_call.1} parent=11 // pred_check
          %p313 = pneg %p93
        $region18: #{tpu_custom_call.1} parent=11 // pred_check_branch
          %315 = sbr.rel (%p313) target = $region20
        $region19: #{tpu_custom_call.1} parent=11 // pred_region
          %s317 = ssub.s32 16, 16
          %318 = vsyncadd [#allocation6], %s317
          %s320 = sshll.u32 [#allocation5], 4
          %s321 = int_to_ptr.vmem [resolvable:$true] %s320
          %323 = dma.hbm_to_vmem [thread:$0]  %s2, 16, %s321, [#allocation6]
        $region20: #{tpu_custom_call.1} parent=11 // pred_fallthru
          _
        // Predicated region
        $region21: #{tpu_custom_call.1} parent=11 // pred_check
          %p324 = pneg %p114
        $region22: #{tpu_custom_call.1} parent=11 // pred_check_branch
          %326 = sbr.rel (%p324) target = $region24
        $region23: #{tpu_custom_call.1} parent=11 // pred_region
          %s328 = ssub.s32 1024, 1024
          %329 = vsyncadd [#allocation6], %s328
          %s330 = sshll.u32 [#allocation7], 4
          %s331 = int_to_ptr.vmem [resolvable:$true] %s330
          %336 = dma.hbm_to_vmem [thread:$0]  %s3, 1024, %s331, [#allocation6], 128, 128, 8
        $region24: #{tpu_custom_call.1} parent=11 // pred_fallthru
          _
        // Predicated region
        $region25: #{tpu_custom_call.1} parent=11 // pred_check
          %p337 = pneg %p135
        $region26: #{tpu_custom_call.1} parent=11 // pred_check_branch
          %339 = sbr.rel (%p337) target = $region28
        $region27: #{tpu_custom_call.1} parent=11 // pred_region
          %s341 = ssub.s32 16, 16
          %342 = vsyncadd [#allocation9], %s341
          %s344 = sshll.u32 [#allocation8], 4
          %s345 = int_to_ptr.vmem [resolvable:$true] %s344
          %347 = dma.hbm_to_vmem [thread:$0]  %s4, 16, %s345, [#allocation9]
        $region28: #{tpu_custom_call.1} parent=11 // pred_fallthru
          _
        // Predicated region
        $region29: #{tpu_custom_call.1} parent=11 // pred_check
          %p348 = pneg %p156
        $region30: #{tpu_custom_call.1} parent=11 // pred_check_branch
          %350 = sbr.rel (%p348) target = $region32
        $region31: #{tpu_custom_call.1} parent=11 // pred_region
          %s352 = ssub.s32 4096, 4096
          %353 = vsyncadd [#allocation9], %s352
          %s354 = sshll.u32 [#allocation10], 4
          %s355 = int_to_ptr.vmem [resolvable:$true] %s354
          %360 = dma.hbm_to_vmem [thread:$0]  %s5, 4096, %s355, [#allocation9], 256, 256, 16
        $region32: #{tpu_custom_call.1} parent=11 // pred_fallthru
          _
        // Predicated region
        $region33: #{tpu_custom_call.1} parent=11 // pred_check
          %p361 = pneg %p177
        $region34: #{tpu_custom_call.1} parent=11 // pred_check_branch
          %363 = sbr.rel (%p361) target = $region36
        $region35: #{tpu_custom_call.1} parent=11 // pred_region
          %s365 = ssub.s32 32, 32
          %366 = vsyncadd [#allocation12], %s365
          %s368 = sshll.u32 [#allocation11], 4
          %s369 = int_to_ptr.vmem [resolvable:$true] %s368
          %371 = dma.hbm_to_vmem [thread:$0]  %s6, 32, %s369, [#allocation12]
        $region36: #{tpu_custom_call.1} parent=11 // pred_fallthru
          _
        // Predicated region
        $region37: #{tpu_custom_call.1} parent=11 // pred_check
          %p372 = pneg %p198
        $region38: #{tpu_custom_call.1} parent=11 // pred_check_branch
          %374 = sbr.rel (%p372) target = $region40
        $region39: #{tpu_custom_call.1} parent=11 // pred_region
          %s376 = ssub.s32 4096, 4096
          %377 = vsyncadd [#allocation12], %s376
          %s378 = sshll.u32 [#allocation13], 4
          %s379 = int_to_ptr.vmem [resolvable:$true] %s378
          %384 = dma.hbm_to_vmem [thread:$0]  %s7, 4096, %s379, [#allocation12], 128, 128, 8
        $region40: #{tpu_custom_call.1} parent=11 // pred_fallthru
          _
        // Predicated region
        $region41: #{tpu_custom_call.1} parent=11 // pred_check
          %p385 = pneg %p219
        $region42: #{tpu_custom_call.1} parent=11 // pred_check_branch
          %387 = sbr.rel (%p385) target = $region44
        $region43: #{tpu_custom_call.1} parent=11 // pred_region
          %s389 = ssub.s32 16, 16
          %390 = vsyncadd [#allocation15], %s389
          %s392 = sshll.u32 [#allocation14], 4
          %s393 = int_to_ptr.vmem [resolvable:$true] %s392
          %395 = dma.hbm_to_vmem [thread:$0]  %s8, 16, %s393, [#allocation15]
        $region44: #{tpu_custom_call.1} parent=11 // pred_fallthru
          _
        // Predicated region
        $region45: #{tpu_custom_call.1} parent=11 // pred_check
          %p396 = pneg %p240
        $region46: #{tpu_custom_call.1} parent=11 // pred_check_branch
          %398 = sbr.rel (%p396) target = $region48
        $region47: #{tpu_custom_call.1} parent=11 // pred_region
          _
        $region48: #{tpu_custom_call.1} parent=11 // pred_fallthru
          _
        // Predicated region
        $region49: #{tpu_custom_call.1} parent=11 // pred_check
          %p399 = pneg %p261
        $region50: #{tpu_custom_call.1} parent=11 // pred_check_branch
          %401 = sbr.rel (%p399) target = $region52
        $region51: #{tpu_custom_call.1} parent=11 // pred_region
          _
        $region52: #{tpu_custom_call.1} parent=11 // pred_fallthru
          _
      $region12: #{tpu_custom_call.1} parent=5 // pred_fallthru
        _
      %p402 = scmp.lt.s32.totalorder %s25, 2
      // Predicated region
      $region53: #{tpu_custom_call.1} parent=5 // pred_check
        %p403 = pneg %p402
      $region54: #{tpu_custom_call.1} parent=5 // pred_check_branch
        %405 = sbr.rel (%p403) target = $region56
      $region55: #{tpu_custom_call.1} parent=5 // pred_region
        // Predicated region
        $region57: #{tpu_custom_call.1} parent=55 // pred_check
          %p406 = pneg %p45
        $region58: #{tpu_custom_call.1} parent=55 // pred_check_branch
          %408 = sbr.rel (%p406) target = $region60
        $region59: #{tpu_custom_call.1} parent=55 // pred_region
          %s409 = smul.u32 8, %s25
          %p410 = scmp.lt.s32.totalorder %s409, 15
          %s411 = scalar_select %p410, %s409, 15
          %s412 = smul.addr %s411, 4
          %s413 = scalar_lea.vmem %s0, %s412
          %s414 = smul.u32 8, %s25
        $region60: #{tpu_custom_call.1} parent=55 // pred_fallthru
          _
      $region56: #{tpu_custom_call.1} parent=5 // pred_fallthru
        _
      %p415 = scmp.le.s32.totalorder 1, %s25
      %p416 = scmp.lt.s32.totalorder %s25, 3
      %p417 = pnand %p415, %p416
      %p418 = pneg %p417
      // Predicated region
      $region61: #{tpu_custom_call.1} parent=5 // pred_check
        _
      $region62: #{tpu_custom_call.1} parent=5 // pred_check_branch
        %420 = sbr.rel (%p417) target = $region64
      $region63: #{tpu_custom_call.1} parent=5 // pred_region
        %s421 = ssub.s32 %s25, 1
        // Predicated region
        $region65: #{tpu_custom_call.1} parent=63 // pred_check
          %p422 = pneg %p72
        $region66: #{tpu_custom_call.1} parent=63 // pred_check_branch
          %424 = sbr.rel (%p422) target = $region68
        $region67: #{tpu_custom_call.1} parent=63 // pred_region
          %425 = dma.done [#allocation3], 64
        $region68: #{tpu_custom_call.1} parent=63 // pred_fallthru
          _
        // Predicated region
        $region69: #{tpu_custom_call.1} parent=63 // pred_check
          %p426 = pneg %p93
        $region70: #{tpu_custom_call.1} parent=63 // pred_check_branch
          %428 = sbr.rel (%p426) target = $region72
        $region71: #{tpu_custom_call.1} parent=63 // pred_region
          %429 = dma.done [#allocation6], 16
        $region72: #{tpu_custom_call.1} parent=63 // pred_fallthru
          _
        // Predicated region
        $region73: #{tpu_custom_call.1} parent=63 // pred_check
          %p430 = pneg %p114
        $region74: #{tpu_custom_call.1} parent=63 // pred_check_branch
          %432 = sbr.rel (%p430) target = $region76
        $region75: #{tpu_custom_call.1} parent=63 // pred_region
          %433 = dma.done [#allocation6], 1024
        $region76: #{tpu_custom_call.1} parent=63 // pred_fallthru
          _
        // Predicated region
        $region77: #{tpu_custom_call.1} parent=63 // pred_check
          %p434 = pneg %p135
        $region78: #{tpu_custom_call.1} parent=63 // pred_check_branch
          %436 = sbr.rel (%p434) target = $region80
        $region79: #{tpu_custom_call.1} parent=63 // pred_region
          %437 = dma.done [#allocation9], 16
        $region80: #{tpu_custom_call.1} parent=63 // pred_fallthru
          _
        // Predicated region
        $region81: #{tpu_custom_call.1} parent=63 // pred_check
          %p438 = pneg %p156
        $region82: #{tpu_custom_call.1} parent=63 // pred_check_branch
          %440 = sbr.rel (%p438) target = $region84
        $region83: #{tpu_custom_call.1} parent=63 // pred_region
          %441 = dma.done [#allocation9], 4096
        $region84: #{tpu_custom_call.1} parent=63 // pred_fallthru
          _
        // Predicated region
        $region85: #{tpu_custom_call.1} parent=63 // pred_check
          %p442 = pneg %p177
        $region86: #{tpu_custom_call.1} parent=63 // pred_check_branch
          %444 = sbr.rel (%p442) target = $region88
        $region87: #{tpu_custom_call.1} parent=63 // pred_region
          %445 = dma.done [#allocation12], 32
        $region88: #{tpu_custom_call.1} parent=63 // pred_fallthru
          _
        // Predicated region
        $region89: #{tpu_custom_call.1} parent=63 // pred_check
          %p446 = pneg %p198
        $region90: #{tpu_custom_call.1} parent=63 // pred_check_branch
          %448 = sbr.rel (%p446) target = $region92
        $region91: #{tpu_custom_call.1} parent=63 // pred_region
          %449 = dma.done [#allocation12], 4096
        $region92: #{tpu_custom_call.1} parent=63 // pred_fallthru
          _
        // Predicated region
        $region93: #{tpu_custom_call.1} parent=63 // pred_check
          %p450 = pneg %p219
        $region94: #{tpu_custom_call.1} parent=63 // pred_check_branch
          %452 = sbr.rel (%p450) target = $region96
        $region95: #{tpu_custom_call.1} parent=63 // pred_region
          %453 = dma.done [#allocation15], 16
        $region96: #{tpu_custom_call.1} parent=63 // pred_fallthru
          _
        %s454 = smul.u32 8, %s30
        %p455 = scmp.lt.s32.totalorder %s454, 15
        %s456 = scalar_select %p455, %s454, 15
        %s457 = smul.addr %s456, 4
        %s458 = scalar_lea.vmem %s0, %s457
        %p459 = pneg %p51
        %p460 = pneg %p48
        %p461 = pneg %p72
        %p462 = pneg %p69
        %p463 = pneg %p93
        %p464 = pneg %p90
        %p465 = pneg %p114
        %p466 = pneg %p111
        %p467 = pneg %p135
        %p468 = pneg %p132
        %p469 = pneg %p156
        %p470 = pneg %p153
        %p471 = pneg %p177
        %p472 = pneg %p174
        %p473 = pneg %p198
        %p474 = pneg %p195
        %p475 = pneg %p219
        %p476 = pneg %p216
        %p477 = pneg %p240
        %p478 = pneg %p237
        %p479 = pneg %p261
        %p480 = pneg %p258
        %p481 = pneg %p287
        %p482 = pneg %p284
        %s483 = sand.u32 %s274, 1
        %s484 = scalar_lea.sflag [#allocation4], %s483
        %s485 = sand.u32 %s274, 1
        %s486 = smul.addr %s485, 8
        %s487 = scalar_lea.vmem [#allocation16], %s486
        %s488 = smul.u32 8, %s30
        %p489 = scmp.lt.s32.totalorder %s488, 15
        %s490 = scalar_select %p489, %s488, 15
        %s491 = smul.addr %s490, 4
        %s492 = scalar_lea.vmem %s0, %s491
        %s493 = smul.u32 8, %s30
        %v494 = vld [vmem:[%s492] sm:$0x7]
        %v495 = vld [vmem:[%s492 + $0x4] sm:$0x7]
        %v496 = vld [vmem:[%s492 + $0x8] sm:$0x7]
        %v497 = vld [vmem:[%s492 + $0xc] sm:$0x7]
        %v498 = vld [vmem:[%s492 + $0x10] sm:$0x7]
        %v499 = vld [vmem:[%s492 + $0x14] sm:$0x7]
        %v500 = vld [vmem:[%s492 + $0x18] sm:$0x7]
        %v501 = vld [vmem:[%s492 + $0x1c] sm:$0x7]
        %vm502 = vcmask 124928
        %v503 = vsel %vm502, %v494, -inf
        %504 = vmax.xlane.f32.xlu0 %v503
        %v505 = vpop.xlane.xlu0 %504
        %v506 = vsel %vm502, %v495, -inf
        %507 = vmax.xlane.f32.xlu0 %v506
        %v508 = vpop.xlane.xlu0 %507
        %v509 = vsel %vm502, %v496, -inf
        %510 = vmax.xlane.f32.xlu0 %v509
        %v511 = vpop.xlane.xlu0 %510
        %v512 = vsel %vm502, %v497, -inf
        %513 = vmax.xlane.f32.xlu0 %v512
        %v514 = vpop.xlane.xlu0 %513
        %v515 = vsel %vm502, %v498, -inf
        %516 = vmax.xlane.f32.xlu0 %v515
        %v517 = vpop.xlane.xlu0 %516
        %v518 = vsel %vm502, %v499, -inf
        %519 = vmax.xlane.f32.xlu0 %v518
        %v520 = vpop.xlane.xlu0 %519
        %v521 = vsel %vm502, %v500, -inf
        %522 = vmax.xlane.f32.xlu0 %v521
        %v523 = vpop.xlane.xlu0 %522
        %v524 = vsel %vm502, %v501, -inf
        %525 = vmax.xlane.f32.xlu0 %v524
        %v526 = vpop.xlane.xlu0 %525
        %v527 = vsub.f32 %v494, %v505
        %v528 = vsub.f32 %v495, %v508
        %v529 = vsub.f32 %v496, %v511
        %v530 = vsub.f32 %v497, %v514
        %v531 = vsub.f32 %v498, %v517
        %v532 = vsub.f32 %v499, %v520
        %v533 = vsub.f32 %v500, %v523
        %v534 = vsub.f32 %v501, %v526
        %535 = vxpose.xlu0.b32.start [1/16] %v527, 128
        %536 = vxpose.xlu0.b32.cont [2/16] 0.0, 128
        %537 = vxpose.xlu0.b32.cont [3/16] 0.0, 128
        %538 = vxpose.xlu0.b32.cont [4/16] 0.0, 128
        %539 = vxpose.xlu0.b32.cont [5/16] 0.0, 128
        %540 = vxpose.xlu0.b32.cont [6/16] 0.0, 128
        %541 = vxpose.xlu0.b32.cont [7/16] 0.0, 128
        %542 = vxpose.xlu0.b32.cont [8/16] 0.0, 128
        %543 = vxpose.xlu0.b32.cont [9/16] 0.0, 128
        %544 = vxpose.xlu0.b32.cont [10/16] 0.0, 128
        %545 = vxpose.xlu0.b32.cont [11/16] 0.0, 128
        %546 = vxpose.xlu0.b32.cont [12/16] 0.0, 128
        %547 = vxpose.xlu0.b32.cont [13/16] 0.0, 128
        %548 = vxpose.xlu0.b32.cont [14/16] 0.0, 128
        %549 = vxpose.xlu0.b32.cont [15/16] 0.0, 128
        %550 = vxpose.xlu0.b32.end [16/16] 0.0, 128
        %v551 = vpop.trf.xlu0
        %v552 = vpop.trf.xlu0
        %v553 = vpop.trf.xlu0
        %v554 = vpop.trf.xlu0
        %v555 = vpop.trf.xlu0
        %v556 = vpop.trf.xlu0
        %v557 = vpop.trf.xlu0
        %v558 = vpop.trf.xlu0
        %v559 = vpop.trf.xlu0
        %v560 = vpop.trf.xlu0
        %v561 = vpop.trf.xlu0
        %v562 = vpop.trf.xlu0
        %v563 = vpop.trf.xlu0
        %v564 = vpop.trf.xlu0
        %v565 = vpop.trf.xlu0
        %v566 = vpop.trf.xlu0
        %567 = vxpose.xlu0.b32.start [1/16] %v528, 128
        %568 = vxpose.xlu0.b32.cont [2/16] 0.0, 128
        %569 = vxpose.xlu0.b32.cont [3/16] 0.0, 128
        %570 = vxpose.xlu0.b32.cont [4/16] 0.0, 128
        %571 = vxpose.xlu0.b32.cont [5/16] 0.0, 128
        %572 = vxpose.xlu0.b32.cont [6/16] 0.0, 128
        %573 = vxpose.xlu0.b32.cont [7/16] 0.0, 128
        %574 = vxpose.xlu0.b32.cont [8/16] 0.0, 128
        %575 = vxpose.xlu0.b32.cont [9/16] 0.0, 128
        %576 = vxpose.xlu0.b32.cont [10/16] 0.0, 128
        %577 = vxpose.xlu0.b32.cont [11/16] 0.0, 128
        %578 = vxpose.xlu0.b32.cont [12/16] 0.0, 128
        %579 = vxpose.xlu0.b32.cont [13/16] 0.0, 128
        %580 = vxpose.xlu0.b32.cont [14/16] 0.0, 128
        %581 = vxpose.xlu0.b32.cont [15/16] 0.0, 128
        %582 = vxpose.xlu0.b32.end [16/16] 0.0, 128
        %v583 = vpop.trf.xlu0
        %v584 = vpop.trf.xlu0
        %v585 = vpop.trf.xlu0
        %v586 = vpop.trf.xlu0
        %v587 = vpop.trf.xlu0
        %v588 = vpop.trf.xlu0
        %v589 = vpop.trf.xlu0
        %v590 = vpop.trf.xlu0
        %v591 = vpop.trf.xlu0
        %v592 = vpop.trf.xlu0
        %v593 = vpop.trf.xlu0
        %v594 = vpop.trf.xlu0
        %v595 = vpop.trf.xlu0
        %v596 = vpop.trf.xlu0
        %v597 = vpop.trf.xlu0
        %v598 = vpop.trf.xlu0
        %599 = vxpose.xlu0.b32.start [1/16] %v529, 128
        %600 = vxpose.xlu0.b32.cont [2/16] 0.0, 128
        %601 = vxpose.xlu0.b32.cont [3/16] 0.0, 128
        %602 = vxpose.xlu0.b32.cont [4/16] 0.0, 128
        %603 = vxpose.xlu0.b32.cont [5/16] 0.0, 128
        %604 = vxpose.xlu0.b32.cont [6/16] 0.0, 128
        %605 = vxpose.xlu0.b32.cont [7/16] 0.0, 128
        %606 = vxpose.xlu0.b32.cont [8/16] 0.0, 128
        %607 = vxpose.xlu0.b32.cont [9/16] 0.0, 128
        %608 = vxpose.xlu0.b32.cont [10/16] 0.0, 128
        %609 = vxpose.xlu0.b32.cont [11/16] 0.0, 128
        %610 = vxpose.xlu0.b32.cont [12/16] 0.0, 128
        %611 = vxpose.xlu0.b32.cont [13/16] 0.0, 128
        %612 = vxpose.xlu0.b32.cont [14/16] 0.0, 128
        %613 = vxpose.xlu0.b32.cont [15/16] 0.0, 128
        %614 = vxpose.xlu0.b32.end [16/16] 0.0, 128
        %v615 = vpop.trf.xlu0
        %v616 = vpop.trf.xlu0
        %v617 = vpop.trf.xlu0
        %v618 = vpop.trf.xlu0
        %v619 = vpop.trf.xlu0
        %v620 = vpop.trf.xlu0
        %v621 = vpop.trf.xlu0
        %v622 = vpop.trf.xlu0
        %v623 = vpop.trf.xlu0
        %v624 = vpop.trf.xlu0
        %v625 = vpop.trf.xlu0
        %v626 = vpop.trf.xlu0
        %v627 = vpop.trf.xlu0
        %v628 = vpop.trf.xlu0
        %v629 = vpop.trf.xlu0
        %v630 = vpop.trf.xlu0
        %631 = vxpose.xlu0.b32.start [1/16] %v530, 128
        %632 = vxpose.xlu0.b32.cont [2/16] 0.0, 128
        %633 = vxpose.xlu0.b32.cont [3/16] 0.0, 128
        %634 = vxpose.xlu0.b32.cont [4/16] 0.0, 128
        %635 = vxpose.xlu0.b32.cont [5/16] 0.0, 128
        %636 = vxpose.xlu0.b32.cont [6/16] 0.0, 128
        %637 = vxpose.xlu0.b32.cont [7/16] 0.0, 128
        %638 = vxpose.xlu0.b32.cont [8/16] 0.0, 128
        %639 = vxpose.xlu0.b32.cont [9/16] 0.0, 128
        %640 = vxpose.xlu0.b32.cont [10/16] 0.0, 128
        %641 = vxpose.xlu0.b32.cont [11/16] 0.0, 128
        %642 = vxpose.xlu0.b32.cont [12/16] 0.0, 128
        %643 = vxpose.xlu0.b32.cont [13/16] 0.0, 128
        %644 = vxpose.xlu0.b32.cont [14/16] 0.0, 128
        %645 = vxpose.xlu0.b32.cont [15/16] 0.0, 128
        %646 = vxpose.xlu0.b32.end [16/16] 0.0, 128
        %v647 = vpop.trf.xlu0
        %v648 = vpop.trf.xlu0
        %v649 = vpop.trf.xlu0
        %v650 = vpop.trf.xlu0
        %v651 = vpop.trf.xlu0
        %v652 = vpop.trf.xlu0
        %v653 = vpop.trf.xlu0
        %v654 = vpop.trf.xlu0
        %v655 = vpop.trf.xlu0
        %v656 = vpop.trf.xlu0
        %v657 = vpop.trf.xlu0
        %v658 = vpop.trf.xlu0
        %v659 = vpop.trf.xlu0
        %v660 = vpop.trf.xlu0
        %v661 = vpop.trf.xlu0
        %v662 = vpop.trf.xlu0
        %663 = vxpose.xlu0.b32.start [1/16] %v531, 128
        %664 = vxpose.xlu0.b32.cont [2/16] 0.0, 128
        %665 = vxpose.xlu0.b32.cont [3/16] 0.0, 128
        %666 = vxpose.xlu0.b32.cont [4/16] 0.0, 128
        %667 = vxpose.xlu0.b32.cont [5/16] 0.0, 128
        %668 = vxpose.xlu0.b32.cont [6/16] 0.0, 128
        %669 = vxpose.xlu0.b32.cont [7/16] 0.0, 128
        %670 = vxpose.xlu0.b32.cont [8/16] 0.0, 128
        %671 = vxpose.xlu0.b32.cont [9/16] 0.0, 128
        %672 = vxpose.xlu0.b32.cont [10/16] 0.0, 128
        %673 = vxpose.xlu0.b32.cont [11/16] 0.0, 128
        %674 = vxpose.xlu0.b32.cont [12/16] 0.0, 128
        %675 = vxpose.xlu0.b32.cont [13/16] 0.0, 128
        %676 = vxpose.xlu0.b32.cont [14/16] 0.0, 128
        %677 = vxpose.xlu0.b32.cont [15/16] 0.0, 128
        %678 = vxpose.xlu0.b32.end [16/16] 0.0, 128
        %v679 = vpop.trf.xlu0
        %v680 = vpop.trf.xlu0
        %v681 = vpop.trf.xlu0
        %v682 = vpop.trf.xlu0
        %v683 = vpop.trf.xlu0
        %v684 = vpop.trf.xlu0
        %v685 = vpop.trf.xlu0
        %v686 = vpop.trf.xlu0
        %v687 = vpop.trf.xlu0
        %v688 = vpop.trf.xlu0
        %v689 = vpop.trf.xlu0
        %v690 = vpop.trf.xlu0
        %v691 = vpop.trf.xlu0
        %v692 = vpop.trf.xlu0
        %v693 = vpop.trf.xlu0
        %v694 = vpop.trf.xlu0
        %695 = vxpose.xlu0.b32.start [1/16] %v532, 128
        %696 = vxpose.xlu0.b32.cont [2/16] 0.0, 128
        %697 = vxpose.xlu0.b32.cont [3/16] 0.0, 128
        %698 = vxpose.xlu0.b32.cont [4/16] 0.0, 128
        %699 = vxpose.xlu0.b32.cont [5/16] 0.0, 128
        %700 = vxpose.xlu0.b32.cont [6/16] 0.0, 128
        %701 = vxpose.xlu0.b32.cont [7/16] 0.0, 128
        %702 = vxpose.xlu0.b32.cont [8/16] 0.0, 128
        %703 = vxpose.xlu0.b32.cont [9/16] 0.0, 128
        %704 = vxpose.xlu0.b32.cont [10/16] 0.0, 128
        %705 = vxpose.xlu0.b32.cont [11/16] 0.0, 128
        %706 = vxpose.xlu0.b32.cont [12/16] 0.0, 128
        %707 = vxpose.xlu0.b32.cont [13/16] 0.0, 128
        %708 = vxpose.xlu0.b32.cont [14/16] 0.0, 128
        %709 = vxpose.xlu0.b32.cont [15/16] 0.0, 128
        %710 = vxpose.xlu0.b32.end [16/16] 0.0, 128
        %v711 = vpop.trf.xlu0
        %v712 = vpop.trf.xlu0
        %v713 = vpop.trf.xlu0
        %v714 = vpop.trf.xlu0
        %v715 = vpop.trf.xlu0
        %v716 = vpop.trf.xlu0
        %v717 = vpop.trf.xlu0
        %v718 = vpop.trf.xlu0
        %v719 = vpop.trf.xlu0
        %v720 = vpop.trf.xlu0
        %v721 = vpop.trf.xlu0
        %v722 = vpop.trf.xlu0
        %v723 = vpop.trf.xlu0
        %v724 = vpop.trf.xlu0
        %v725 = vpop.trf.xlu0
        %v726 = vpop.trf.xlu0
        %727 = vxpose.xlu0.b32.start [1/16] %v533, 128
        %728 = vxpose.xlu0.b32.cont [2/16] 0.0, 128
        %729 = vxpose.xlu0.b32.cont [3/16] 0.0, 128
        %730 = vxpose.xlu0.b32.cont [4/16] 0.0, 128
        %731 = vxpose.xlu0.b32.cont [5/16] 0.0, 128
        %732 = vxpose.xlu0.b32.cont [6/16] 0.0, 128
        %733 = vxpose.xlu0.b32.cont [7/16] 0.0, 128
        %734 = vxpose.xlu0.b32.cont [8/16] 0.0, 128
        %735 = vxpose.xlu0.b32.cont [9/16] 0.0, 128
        %736 = vxpose.xlu0.b32.cont [10/16] 0.0, 128
        %737 = vxpose.xlu0.b32.cont [11/16] 0.0, 128
        %738 = vxpose.xlu0.b32.cont [12/16] 0.0, 128
        %739 = vxpose.xlu0.b32.cont [13/16] 0.0, 128
        %740 = vxpose.xlu0.b32.cont [14/16] 0.0, 128
        %741 = vxpose.xlu0.b32.cont [15/16] 0.0, 128
        %742 = vxpose.xlu0.b32.end [16/16] 0.0, 128
        %v743 = vpop.trf.xlu0
        %v744 = vpop.trf.xlu0
        %v745 = vpop.trf.xlu0
        %v746 = vpop.trf.xlu0
        %v747 = vpop.trf.xlu0
        %v748 = vpop.trf.xlu0
        %v749 = vpop.trf.xlu0
        %v750 = vpop.trf.xlu0
        %v751 = vpop.trf.xlu0
        %v752 = vpop.trf.xlu0
        %v753 = vpop.trf.xlu0
        %v754 = vpop.trf.xlu0
        %v755 = vpop.trf.xlu0
        %v756 = vpop.trf.xlu0
        %v757 = vpop.trf.xlu0
        %v758 = vpop.trf.xlu0
        %759 = vxpose.xlu0.b32.start [1/16] %v534, 128
        %760 = vxpose.xlu0.b32.cont [2/16] 0.0, 128
        %761 = vxpose.xlu0.b32.cont [3/16] 0.0, 128
        %762 = vxpose.xlu0.b32.cont [4/16] 0.0, 128
        %763 = vxpose.xlu0.b32.cont [5/16] 0.0, 128
        %764 = vxpose.xlu0.b32.cont [6/16] 0.0, 128
        %765 = vxpose.xlu0.b32.cont [7/16] 0.0, 128
        %766 = vxpose.xlu0.b32.cont [8/16] 0.0, 128
        %767 = vxpose.xlu0.b32.cont [9/16] 0.0, 128
        %768 = vxpose.xlu0.b32.cont [10/16] 0.0, 128
        %769 = vxpose.xlu0.b32.cont [11/16] 0.0, 128
        %770 = vxpose.xlu0.b32.cont [12/16] 0.0, 128
        %771 = vxpose.xlu0.b32.cont [13/16] 0.0, 128
        %772 = vxpose.xlu0.b32.cont [14/16] 0.0, 128
        %773 = vxpose.xlu0.b32.cont [15/16] 0.0, 128
        %774 = vxpose.xlu0.b32.end [16/16] 0.0, 128
        %v775 = vpop.trf.xlu0
        %v776 = vpop.trf.xlu0
        %v777 = vpop.trf.xlu0
        %v778 = vpop.trf.xlu0
        %v779 = vpop.trf.xlu0
        %v780 = vpop.trf.xlu0
        %v781 = vpop.trf.xlu0
        %v782 = vpop.trf.xlu0
        %v783 = vpop.trf.xlu0
        %v784 = vpop.trf.xlu0
        %v785 = vpop.trf.xlu0
        %v786 = vpop.trf.xlu0
        %v787 = vpop.trf.xlu0
        %v788 = vpop.trf.xlu0
        %v789 = vpop.trf.xlu0
        %v790 = vpop.trf.xlu0
        %v791 = vld [vmem:[#allocation2] sm:$0x7]
        %v792 = vld [vmem:[#allocation5] sm:$0x1]
        %v794 = vlaneseq
        %v795 = vshrl.u32 %v794, 7
        %v796 = vsub.s32 0, %v795
        %v797 = vrot.slane %v792, %v796
        %vm799 = vcmask 23552
        %v801 = vsel %vm799, %v551, 0
        %v804 = vsel %vm799, %v552, 0
        %v807 = vsel %vm799, %v583, 0
        %v810 = vsel %vm799, %v584, 0
        %v813 = vsel %vm799, %v615, 0
        %v816 = vsel %vm799, %v616, 0
        %v819 = vsel %vm799, %v647, 0
        %v822 = vsel %vm799, %v648, 0
        %v825 = vsel %vm799, %v679, 0
        %v828 = vsel %vm799, %v680, 0
        %v831 = vsel %vm799, %v711, 0
        %v834 = vsel %vm799, %v712, 0
        %v837 = vsel %vm799, %v743, 0
        %v840 = vsel %vm799, %v744, 0
        %v843 = vsel %vm799, %v775, 0
        %v846 = vsel %vm799, %v776, 0
        %vm848 = vcmask 1042432
        %v850 = vsel %vm848, %v791, 0
        %852 = vmatprep.subr.mxu0 0.0
        %853 = vmatpush1.msra.mxu0 0.0
        %854 = vmatprep.subr.mxu0 0.0
        %855 = vmatpush1.msra.mxu0 0.0
        %856 = vmatprep.subr.mxu0 0.0
        %857 = vmatpush1.msra.mxu0 0.0
        %858 = vmatprep.subr.mxu0 0.0
        %859 = vmatpush1.msra.mxu0 0.0
        %860 = vmatprep.subr.mxu0 0.0
        %861 = vmatpush1.msra.mxu0 0.0
        %862 = vmatprep.subr.mxu0 0.0
        %863 = vmatpush1.msra.mxu0 0.0
        %864 = vmatprep.subr.mxu0 0.0
        %865 = vmatpush1.msra.mxu0 0.0
        %866 = vmatprep.subr.mxu0 0.0
        %867 = vmatpush1.msra.mxu0 0.0
        %868 = vmatprep.subr.mxu0 0.0
        %869 = vmatpush1.msra.mxu0 0.0
        %870 = vmatprep.subr.mxu0 0.0
        %871 = vmatpush1.msra.mxu0 0.0
        %872 = vmatprep.subr.mxu0 0.0
        %873 = vmatpush1.msra.mxu0 0.0
        %874 = vmatprep.subr.mxu0 0.0
        %875 = vmatpush1.msra.mxu0 0.0
        %876 = vmatprep.subr.mxu0 0.0
        %877 = vmatpush1.msra.mxu0 0.0
        %878 = vmatprep.subr.mxu0 0.0
        %879 = vmatpush1.msra.mxu0 0.0
        %880 = vmatprep.subr.mxu0 0.0
        %881 = vmatpush1.msra.mxu0 0.0
        %882 = vmatprep.subr.mxu0 0.0
        %883 = vmatpush1.msra.mxu0 %v850
        %884 = vmatprep.subr.mxu0 0.0
        %885 = vmatpush2.msra.mxu0 0.0
        %886 = vmatprep.subr.mxu0 0.0
        %887 = vmatpush2.msra.mxu0 0.0
        %888 = vmatprep.subr.mxu0 0.0
        %889 = vmatpush2.msra.mxu0 0.0
        %890 = vmatprep.subr.mxu0 0.0
        %891 = vmatpush2.msra.mxu0 0.0
        %892 = vmatprep.subr.mxu0 0.0
        %893 = vmatpush2.msra.mxu0 0.0
        %894 = vmatprep.subr.mxu0 0.0
        %895 = vmatpush2.msra.mxu0 0.0
        %896 = vmatprep.subr.mxu0 0.0
        %897 = vmatpush2.msra.mxu0 0.0
        %898 = vmatprep.subr.mxu0 0.0
        %899 = vmatpush2.msra.mxu0 0.0
        %900 = vmatprep.subr.mxu0 0.0
        %901 = vmatpush2.msra.mxu0 0.0
        %902 = vmatprep.subr.mxu0 0.0
        %903 = vmatpush2.msra.mxu0 0.0
        %904 = vmatprep.subr.mxu0 0.0
        %905 = vmatpush2.msra.mxu0 0.0
        %906 = vmatprep.subr.mxu0 0.0
        %907 = vmatpush2.msra.mxu0 0.0
        %908 = vmatprep.subr.mxu0 0.0
        %909 = vmatpush2.msra.mxu0 0.0
        %910 = vmatprep.subr.mxu0 0.0
        %911 = vmatpush2.msra.mxu0 0.0
        %912 = vmatprep.subr.mxu0 0.0
        %913 = vmatpush2.msra.mxu0 0.0
        %914 = vmatprep.subr.mxu0 0.0
        %915 = vmatpush2.msra.mxu0 0.0
        %916 = vmatprep.mubr.f32.mxu0 0.0
        %917 = vmatmul.mubr.f32.gmra.mxu0 %v801
        %v918 = vpop.f32.mrf.mxu0
        %v919 = vadd.f32 %v797, %v918
        %v920 = vpop.f32.mrf.mxu0
        %921 = vmatprep.mubr.f32.mxu0 0.0
        %922 = vmatmul.mubr.f32.gmra.mxu0 %v804
        %v923 = vpop.f32.mrf.mxu0
        %v924 = vadd.f32 %v797, %v923
        %v925 = vpop.f32.mrf.mxu0
        %926 = vmatprep.mubr.f32.mxu0 0.0
        %927 = vmatmul.mubr.f32.gmra.mxu0 %v807
        %v928 = vpop.f32.mrf.mxu0
        %v929 = vadd.f32 %v797, %v928
        %v930 = vpop.f32.mrf.mxu0
        %931 = vmatprep.mubr.f32.mxu0 0.0
        %932 = vmatmul.mubr.f32.gmra.mxu0 %v810
        %v933 = vpop.f32.mrf.mxu0
        %v934 = vadd.f32 %v797, %v933
        %v935 = vpop.f32.mrf.mxu0
        %936 = vmatprep.mubr.f32.mxu0 0.0
        %937 = vmatmul.mubr.f32.gmra.mxu0 %v813
        %v938 = vpop.f32.mrf.mxu0
        %v939 = vadd.f32 %v797, %v938
        %v940 = vpop.f32.mrf.mxu0
        %941 = vmatprep.mubr.f32.mxu0 0.0
        %942 = vmatmul.mubr.f32.gmra.mxu0 %v816
        %v943 = vpop.f32.mrf.mxu0
        %v944 = vadd.f32 %v797, %v943
        %v945 = vpop.f32.mrf.mxu0
        %946 = vmatprep.mubr.f32.mxu0 0.0
        %947 = vmatmul.mubr.f32.gmra.mxu0 %v819
        %v948 = vpop.f32.mrf.mxu0
        %v949 = vadd.f32 %v797, %v948
        %v950 = vpop.f32.mrf.mxu0
        %951 = vmatprep.mubr.f32.mxu0 0.0
        %952 = vmatmul.mubr.f32.gmra.mxu0 %v822
        %v953 = vpop.f32.mrf.mxu0
        %v954 = vadd.f32 %v797, %v953
        %v955 = vpop.f32.mrf.mxu0
        %956 = vmatprep.mubr.f32.mxu0 0.0
        %957 = vmatmul.mubr.f32.gmra.mxu0 %v825
        %v958 = vpop.f32.mrf.mxu0
        %v959 = vadd.f32 %v797, %v958
        %v960 = vpop.f32.mrf.mxu0
        %961 = vmatprep.mubr.f32.mxu0 0.0
        %962 = vmatmul.mubr.f32.gmra.mxu0 %v828
        %v963 = vpop.f32.mrf.mxu0
        %v964 = vadd.f32 %v797, %v963
        %v965 = vpop.f32.mrf.mxu0
        %966 = vmatprep.mubr.f32.mxu0 0.0
        %967 = vmatmul.mubr.f32.gmra.mxu0 %v831
        %v968 = vpop.f32.mrf.mxu0
        %v969 = vadd.f32 %v797, %v968
        %v970 = vpop.f32.mrf.mxu0
        %971 = vmatprep.mubr.f32.mxu0 0.0
        %972 = vmatmul.mubr.f32.gmra.mxu0 %v834
        %v973 = vpop.f32.mrf.mxu0
        %v974 = vadd.f32 %v797, %v973
        %v975 = vpop.f32.mrf.mxu0
        %976 = vmatprep.mubr.f32.mxu0 0.0
        %977 = vmatmul.mubr.f32.gmra.mxu0 %v837
        %v978 = vpop.f32.mrf.mxu0
        %v979 = vadd.f32 %v797, %v978
        %v980 = vpop.f32.mrf.mxu0
        %981 = vmatprep.mubr.f32.mxu0 0.0
        %982 = vmatmul.mubr.f32.gmra.mxu0 %v840
        %v983 = vpop.f32.mrf.mxu0
        %v984 = vadd.f32 %v797, %v983
        %v985 = vpop.f32.mrf.mxu0
        %986 = vmatprep.mubr.f32.mxu0 0.0
        %987 = vmatmul.mubr.f32.gmra.mxu0 %v843
        %v988 = vpop.f32.mrf.mxu0
        %v989 = vadd.f32 %v797, %v988
        %v990 = vpop.f32.mrf.mxu0
        %991 = vmatprep.mubr.f32.mxu0 0.0
        %992 = vmatmul.mubr.f32.gmra.mxu0 %v846
        %v993 = vpop.f32.mrf.mxu0
        %v994 = vadd.f32 %v797, %v993
        %v995 = vpop.f32.mrf.mxu0
        %996 = vdwg.mxu0
        %v997 = vtanh.pop %v919
        %v998 = vtanh.pop %v924
        %v999 = vtanh.pop %v929
        %v1000 = vtanh.pop %v934
        %v1001 = vtanh.pop %v939
        %v1002 = vtanh.pop %v944
        %v1003 = vtanh.pop %v949
        %v1004 = vtanh.pop %v954
        %v1005 = vtanh.pop %v959
        %v1006 = vtanh.pop %v964
        %v1007 = vtanh.pop %v969
        %v1008 = vtanh.pop %v974
        %v1009 = vtanh.pop %v979
        %v1010 = vtanh.pop %v984
        %v1011 = vtanh.pop %v989
        %v1012 = vtanh.pop %v994
        %vm1013 = vcmask 523264
        %v1014 = vsel %vm1013, %v997, -inf
        %v1015 = vsel %vm1013, %v998, -inf
        %v1016 = vmax.f32 %v1014, %v1015
        %v1017 = vrot.slane %v1016, 4
        %v1018 = vmax.f32 %v1016, %v1017
        %v1019 = vrot.slane %v1018, 2
        %v1020 = vmax.f32 %v1018, %v1019
        %v1021 = vrot.slane %v1020, 1
        %v1022 = vmax.f32 %v1020, %v1021
        %v1023 = vsel %vm1013, %v999, -inf
        %v1024 = vsel %vm1013, %v1000, -inf
        %v1025 = vmax.f32 %v1023, %v1024
        %v1026 = vrot.slane %v1025, 4
        %v1027 = vmax.f32 %v1025, %v1026
        %v1028 = vrot.slane %v1027, 2
        %v1029 = vmax.f32 %v1027, %v1028
        %v1030 = vrot.slane %v1029, 1
        %v1031 = vmax.f32 %v1029, %v1030
        %v1032 = vsel %vm1013, %v1001, -inf
        %v1033 = vsel %vm1013, %v1002, -inf
        %v1034 = vmax.f32 %v1032, %v1033
        %v1035 = vrot.slane %v1034, 4
        %v1036 = vmax.f32 %v1034, %v1035
        %v1037 = vrot.slane %v1036, 2
        %v1038 = vmax.f32 %v1036, %v1037
        %v1039 = vrot.slane %v1038, 1
        %v1040 = vmax.f32 %v1038, %v1039
        %v1041 = vsel %vm1013, %v1003, -inf
        %v1042 = vsel %vm1013, %v1004, -inf
        %v1043 = vmax.f32 %v1041, %v1042
        %v1044 = vrot.slane %v1043, 4
        %v1045 = vmax.f32 %v1043, %v1044
        %v1046 = vrot.slane %v1045, 2
        %v1047 = vmax.f32 %v1045, %v1046
        %v1048 = vrot.slane %v1047, 1
        %v1049 = vmax.f32 %v1047, %v1048
        %v1050 = vsel %vm1013, %v1005, -inf
        %v1051 = vsel %vm1013, %v1006, -inf
        %v1052 = vmax.f32 %v1050, %v1051
        %v1053 = vrot.slane %v1052, 4
        %v1054 = vmax.f32 %v1052, %v1053
        %v1055 = vrot.slane %v1054, 2
        %v1056 = vmax.f32 %v1054, %v1055
        %v1057 = vrot.slane %v1056, 1
        %v1058 = vmax.f32 %v1056, %v1057
        %v1059 = vsel %vm1013, %v1007, -inf
        %v1060 = vsel %vm1013, %v1008, -inf
        %v1061 = vmax.f32 %v1059, %v1060
        %v1062 = vrot.slane %v1061, 4
        %v1063 = vmax.f32 %v1061, %v1062
        %v1064 = vrot.slane %v1063, 2
        %v1065 = vmax.f32 %v1063, %v1064
        %v1066 = vrot.slane %v1065, 1
        %v1067 = vmax.f32 %v1065, %v1066
        %v1068 = vsel %vm1013, %v1009, -inf
        %v1069 = vsel %vm1013, %v1010, -inf
        %v1070 = vmax.f32 %v1068, %v1069
        %v1071 = vrot.slane %v1070, 4
        %v1072 = vmax.f32 %v1070, %v1071
        %v1073 = vrot.slane %v1072, 2
        %v1074 = vmax.f32 %v1072, %v1073
        %v1075 = vrot.slane %v1074, 1
        %v1076 = vmax.f32 %v1074, %v1075
        %v1077 = vsel %vm1013, %v1011, -inf
        %v1078 = vsel %vm1013, %v1012, -inf
        %v1079 = vmax.f32 %v1077, %v1078
        %v1080 = vrot.slane %v1079, 4
        %v1081 = vmax.f32 %v1079, %v1080
        %v1082 = vrot.slane %v1081, 2
        %v1083 = vmax.f32 %v1081, %v1082
        %v1084 = vrot.slane %v1083, 1
        %v1085 = vmax.f32 %v1083, %v1084
        %v1086 = vsub.f32 %v997, %v1022
        %v1087 = vsub.f32 %v998, %v1022
        %v1088 = vsub.f32 %v999, %v1031
        %v1089 = vsub.f32 %v1000, %v1031
        %v1090 = vsub.f32 %v1001, %v1040
        %v1091 = vsub.f32 %v1002, %v1040
        %v1092 = vsub.f32 %v1003, %v1049
        %v1093 = vsub.f32 %v1004, %v1049
        %v1094 = vsub.f32 %v1005, %v1058
        %v1095 = vsub.f32 %v1006, %v1058
        %v1096 = vsub.f32 %v1007, %v1067
        %v1097 = vsub.f32 %v1008, %v1067
        %v1098 = vsub.f32 %v1009, %v1076
        %v1099 = vsub.f32 %v1010, %v1076
        %v1100 = vsub.f32 %v1011, %v1085
        %v1101 = vsub.f32 %v1012, %v1085
        %v1102 = vld [vmem:[#allocation7] sm:$0xff]
        %v1103 = vld [vmem:[#allocation7 + $0x8] sm:$0xff]
        %v1104 = vld [vmem:[#allocation7 + $0x10] sm:$0xff]
        %v1105 = vld [vmem:[#allocation7 + $0x18] sm:$0xff]
        %v1106 = vld [vmem:[#allocation7 + $0x20] sm:$0xff]
        %v1107 = vld [vmem:[#allocation7 + $0x28] sm:$0xff]
        %v1108 = vld [vmem:[#allocation7 + $0x30] sm:$0xff]
        %v1109 = vld [vmem:[#allocation7 + $0x38] sm:$0xff]
        %v1110 = vld [vmem:[#allocation8] sm:$0x1]
        %v1112 = vlaneseq
        %v1113 = vshrl.u32 %v1112, 7
        %v1114 = vsub.s32 0, %v1113
        %v1115 = vrot.slane %v1110, %v1114
        %v1118 = vsel %vm1013, %v1086, 0
        %v1121 = vsel %vm1013, %v1087, 0
        %v1124 = vsel %vm1013, %v1088, 0
        %v1127 = vsel %vm1013, %v1089, 0
        %v1130 = vsel %vm1013, %v1090, 0
        %v1133 = vsel %vm1013, %v1091, 0
        %v1136 = vsel %vm1013, %v1092, 0
        %v1139 = vsel %vm1013, %v1093, 0
        %v1142 = vsel %vm1013, %v1094, 0
        %v1145 = vsel %vm1013, %v1095, 0
        %v1148 = vsel %vm1013, %v1096, 0
        %v1151 = vsel %vm1013, %v1097, 0
        %v1154 = vsel %vm1013, %v1098, 0
        %v1157 = vsel %vm1013, %v1099, 0
        %v1160 = vsel %vm1013, %v1100, 0
        %v1163 = vsel %vm1013, %v1101, 0
        %1165 = vmatprep.subr.mxu0 0.0
        %1166 = vmatpush1.msra.mxu0 0.0
        %1167 = vmatprep.subr.mxu0 0.0
        %1168 = vmatpush1.msra.mxu0 0.0
        %1169 = vmatprep.subr.mxu0 0.0
        %1170 = vmatpush1.msra.mxu0 0.0
        %1171 = vmatprep.subr.mxu0 0.0
        %1172 = vmatpush1.msra.mxu0 0.0
        %1173 = vmatprep.subr.mxu0 0.0
        %1174 = vmatpush1.msra.mxu0 0.0
        %1175 = vmatprep.subr.mxu0 0.0
        %1176 = vmatpush1.msra.mxu0 0.0
        %1177 = vmatprep.subr.mxu0 0.0
        %1178 = vmatpush1.msra.mxu0 0.0
        %1179 = vmatprep.subr.mxu0 0.0
        %1180 = vmatpush1.msra.mxu0 0.0
        %1181 = vmatprep.subr.mxu0 0.0
        %1182 = vmatpush1.msra.mxu0 %v1109
        %1183 = vmatprep.subr.mxu0 0.0
        %1184 = vmatpush1.msra.mxu0 %v1108
        %1185 = vmatprep.subr.mxu0 0.0
        %1186 = vmatpush1.msra.mxu0 %v1107
        %1187 = vmatprep.subr.mxu0 0.0
        %1188 = vmatpush1.msra.mxu0 %v1106
        %1189 = vmatprep.subr.mxu0 0.0
        %1190 = vmatpush1.msra.mxu0 %v1105
        %1191 = vmatprep.subr.mxu0 0.0
        %1192 = vmatpush1.msra.mxu0 %v1104
        %1193 = vmatprep.subr.mxu0 0.0
        %1194 = vmatpush1.msra.mxu0 %v1103
        %1195 = vmatprep.subr.mxu0 0.0
        %1196 = vmatpush1.msra.mxu0 %v1102
        %1197 = vmatprep.subr.mxu0 0.0
        %1198 = vmatpush2.msra.mxu0 0.0
        %1199 = vmatprep.subr.mxu0 0.0
        %1200 = vmatpush2.msra.mxu0 0.0
        %1201 = vmatprep.subr.mxu0 0.0
        %1202 = vmatpush2.msra.mxu0 0.0
        %1203 = vmatprep.subr.mxu0 0.0
        %1204 = vmatpush2.msra.mxu0 0.0
        %1205 = vmatprep.subr.mxu0 0.0
        %1206 = vmatpush2.msra.mxu0 0.0
        %1207 = vmatprep.subr.mxu0 0.0
        %1208 = vmatpush2.msra.mxu0 0.0
        %1209 = vmatprep.subr.mxu0 0.0
        %1210 = vmatpush2.msra.mxu0 0.0
        %1211 = vmatprep.subr.mxu0 0.0
        %1212 = vmatpush2.msra.mxu0 0.0
        %1213 = vmatprep.subr.mxu0 0.0
        %1214 = vmatpush2.msra.mxu0 0.0
        %1215 = vmatprep.subr.mxu0 0.0
        %1216 = vmatpush2.msra.mxu0 0.0
        %1217 = vmatprep.subr.mxu0 0.0
        %1218 = vmatpush2.msra.mxu0 0.0
        %1219 = vmatprep.subr.mxu0 0.0
        %1220 = vmatpush2.msra.mxu0 0.0
        %1221 = vmatprep.subr.mxu0 0.0
        %1222 = vmatpush2.msra.mxu0 0.0
        %1223 = vmatprep.subr.mxu0 0.0
        %1224 = vmatpush2.msra.mxu0 0.0
        %1225 = vmatprep.subr.mxu0 0.0
        %1226 = vmatpush2.msra.mxu0 0.0
        %1227 = vmatprep.subr.mxu0 0.0
        %1228 = vmatpush2.msra.mxu0 0.0
        %1229 = vmatprep.mubr.f32.mxu0 0.0
        %1230 = vmatmul.mubr.f32.gmra.mxu0 %v1118
        %v1231 = vpop.f32.mrf.mxu0
        %v1232 = vadd.f32 %v1115, %v1231
        %v1233 = vpop.f32.mrf.mxu0
        %1234 = vmatprep.mubr.f32.mxu0 0.0
        %1235 = vmatmul.mubr.f32.gmra.mxu0 %v1121
        %v1236 = vpop.f32.mrf.mxu0
        %v1237 = vadd.f32 %v1115, %v1236
        %v1238 = vpop.f32.mrf.mxu0
        %1239 = vmatprep.mubr.f32.mxu0 0.0
        %1240 = vmatmul.mubr.f32.gmra.mxu0 %v1124
        %v1241 = vpop.f32.mrf.mxu0
        %v1242 = vadd.f32 %v1115, %v1241
        %v1243 = vpop.f32.mrf.mxu0
        %1244 = vmatprep.mubr.f32.mxu0 0.0
        %1245 = vmatmul.mubr.f32.gmra.mxu0 %v1127
        %v1246 = vpop.f32.mrf.mxu0
        %v1247 = vadd.f32 %v1115, %v1246
        %v1248 = vpop.f32.mrf.mxu0
        %1249 = vmatprep.mubr.f32.mxu0 0.0
        %1250 = vmatmul.mubr.f32.gmra.mxu0 %v1130
        %v1251 = vpop.f32.mrf.mxu0
        %v1252 = vadd.f32 %v1115, %v1251
        %v1253 = vpop.f32.mrf.mxu0
        %1254 = vmatprep.mubr.f32.mxu0 0.0
        %1255 = vmatmul.mubr.f32.gmra.mxu0 %v1133
        %v1256 = vpop.f32.mrf.mxu0
        %v1257 = vadd.f32 %v1115, %v1256
        %v1258 = vpop.f32.mrf.mxu0
        %1259 = vmatprep.mubr.f32.mxu0 0.0
        %1260 = vmatmul.mubr.f32.gmra.mxu0 %v1136
        %v1261 = vpop.f32.mrf.mxu0
        %v1262 = vadd.f32 %v1115, %v1261
        %v1263 = vpop.f32.mrf.mxu0
        %1264 = vmatprep.mubr.f32.mxu0 0.0
        %1265 = vmatmul.mubr.f32.gmra.mxu0 %v1139
        %v1266 = vpop.f32.mrf.mxu0
        %v1267 = vadd.f32 %v1115, %v1266
        %v1268 = vpop.f32.mrf.mxu0
        %1269 = vmatprep.mubr.f32.mxu0 0.0
        %1270 = vmatmul.mubr.f32.gmra.mxu0 %v1142
        %v1271 = vpop.f32.mrf.mxu0
        %v1272 = vadd.f32 %v1115, %v1271
        %v1273 = vpop.f32.mrf.mxu0
        %1274 = vmatprep.mubr.f32.mxu0 0.0
        %1275 = vmatmul.mubr.f32.gmra.mxu0 %v1145
        %v1276 = vpop.f32.mrf.mxu0
        %v1277 = vadd.f32 %v1115, %v1276
        %v1278 = vpop.f32.mrf.mxu0
        %1279 = vmatprep.mubr.f32.mxu0 0.0
        %1280 = vmatmul.mubr.f32.gmra.mxu0 %v1148
        %v1281 = vpop.f32.mrf.mxu0
        %v1282 = vadd.f32 %v1115, %v1281
        %v1283 = vpop.f32.mrf.mxu0
        %1284 = vmatprep.mubr.f32.mxu0 0.0
        %1285 = vmatmul.mubr.f32.gmra.mxu0 %v1151
        %v1286 = vpop.f32.mrf.mxu0
        %v1287 = vadd.f32 %v1115, %v1286
        %v1288 = vpop.f32.mrf.mxu0
        %1289 = vmatprep.mubr.f32.mxu0 0.0
        %1290 = vmatmul.mubr.f32.gmra.mxu0 %v1154
        %v1291 = vpop.f32.mrf.mxu0
        %v1292 = vadd.f32 %v1115, %v1291
        %v1293 = vpop.f32.mrf.mxu0
        %1294 = vmatprep.mubr.f32.mxu0 0.0
        %1295 = vmatmul.mubr.f32.gmra.mxu0 %v1157
        %v1296 = vpop.f32.mrf.mxu0
        %v1297 = vadd.f32 %v1115, %v1296
        %v1298 = vpop.f32.mrf.mxu0
        %1299 = vmatprep.mubr.f32.mxu0 0.0
        %1300 = vmatmul.mubr.f32.gmra.mxu0 %v1160
        %v1301 = vpop.f32.mrf.mxu0
        %v1302 = vadd.f32 %v1115, %v1301
        %v1303 = vpop.f32.mrf.mxu0
        %1304 = vmatprep.mubr.f32.mxu0 0.0
        %1305 = vmatmul.mubr.f32.gmra.mxu0 %v1163
        %v1306 = vpop.f32.mrf.mxu0
        %v1307 = vadd.f32 %v1115, %v1306
        %v1308 = vpop.f32.mrf.mxu0
        %1309 = vdwg.mxu0
        %v1310 = vtanh.pop %v1232
        %v1311 = vtanh.pop %v1237
        %v1312 = vtanh.pop %v1242
        %v1313 = vtanh.pop %v1247
        %v1314 = vtanh.pop %v1252
        %v1315 = vtanh.pop %v1257
        %v1316 = vtanh.pop %v1262
        %v1317 = vtanh.pop %v1267
        %v1318 = vtanh.pop %v1272
        %v1319 = vtanh.pop %v1277
        %v1320 = vtanh.pop %v1282
        %v1321 = vtanh.pop %v1287
        %v1322 = vtanh.pop %v1292
        %v1323 = vtanh.pop %v1297
        %v1324 = vtanh.pop %v1302
        %v1325 = vtanh.pop %v1307
        %v1326 = vmax.f32 %v1310, %v1311
        %v1327 = vrot.slane %v1326, 4
        %v1328 = vmax.f32 %v1326, %v1327
        %v1329 = vrot.slane %v1328, 2
        %v1330 = vmax.f32 %v1328, %v1329
        %v1331 = vrot.slane %v1330, 1
        %v1332 = vmax.f32 %v1330, %v1331
        %v1333 = vmax.f32 %v1312, %v1313
        %v1334 = vrot.slane %v1333, 4
        %v1335 = vmax.f32 %v1333, %v1334
        %v1336 = vrot.slane %v1335, 2
        %v1337 = vmax.f32 %v1335, %v1336
        %v1338 = vrot.slane %v1337, 1
        %v1339 = vmax.f32 %v1337, %v1338
        %v1340 = vmax.f32 %v1314, %v1315
        %v1341 = vrot.slane %v1340, 4
        %v1342 = vmax.f32 %v1340, %v1341
        %v1343 = vrot.slane %v1342, 2
        %v1344 = vmax.f32 %v1342, %v1343
        %v1345 = vrot.slane %v1344, 1
        %v1346 = vmax.f32 %v1344, %v1345
        %v1347 = vmax.f32 %v1316, %v1317
        %v1348 = vrot.slane %v1347, 4
        %v1349 = vmax.f32 %v1347, %v1348
        %v1350 = vrot.slane %v1349, 2
        %v1351 = vmax.f32 %v1349, %v1350
        %v1352 = vrot.slane %v1351, 1
        %v1353 = vmax.f32 %v1351, %v1352
        %v1354 = vmax.f32 %v1318, %v1319
        %v1355 = vrot.slane %v1354, 4
        %v1356 = vmax.f32 %v1354, %v1355
        %v1357 = vrot.slane %v1356, 2
        %v1358 = vmax.f32 %v1356, %v1357
        %v1359 = vrot.slane %v1358, 1
        %v1360 = vmax.f32 %v1358, %v1359
        %v1361 = vmax.f32 %v1320, %v1321
        %v1362 = vrot.slane %v1361, 4
        %v1363 = vmax.f32 %v1361, %v1362
        %v1364 = vrot.slane %v1363, 2
        %v1365 = vmax.f32 %v1363, %v1364
        %v1366 = vrot.slane %v1365, 1
        %v1367 = vmax.f32 %v1365, %v1366
        %v1368 = vmax.f32 %v1322, %v1323
        %v1369 = vrot.slane %v1368, 4
        %v1370 = vmax.f32 %v1368, %v1369
        %v1371 = vrot.slane %v1370, 2
        %v1372 = vmax.f32 %v1370, %v1371
        %v1373 = vrot.slane %v1372, 1
        %v1374 = vmax.f32 %v1372, %v1373
        %v1375 = vmax.f32 %v1324, %v1325
        %v1376 = vrot.slane %v1375, 4
        %v1377 = vmax.f32 %v1375, %v1376
        %v1378 = vrot.slane %v1377, 2
        %v1379 = vmax.f32 %v1377, %v1378
        %v1380 = vrot.slane %v1379, 1
        %v1381 = vmax.f32 %v1379, %v1380
        %v1382 = vsub.f32 %v1310, %v1332
        %v1383 = vsub.f32 %v1311, %v1332
        %v1384 = vsub.f32 %v1312, %v1339
        %v1385 = vsub.f32 %v1313, %v1339
        %v1386 = vsub.f32 %v1314, %v1346
        %v1387 = vsub.f32 %v1315, %v1346
        %v1388 = vsub.f32 %v1316, %v1353
        %v1389 = vsub.f32 %v1317, %v1353
        %v1390 = vsub.f32 %v1318, %v1360
        %v1391 = vsub.f32 %v1319, %v1360
        %v1392 = vsub.f32 %v1320, %v1367
        %v1393 = vsub.f32 %v1321, %v1367
        %v1394 = vsub.f32 %v1322, %v1374
        %v1395 = vsub.f32 %v1323, %v1374
        %v1396 = vsub.f32 %v1324, %v1381
        %v1397 = vsub.f32 %v1325, %v1381
        %v1398 = vld [vmem:[#allocation10] sm:$0xff]
        %v1399 = vld [vmem:[#allocation10 + $0x8] sm:$0xff]
        %v1400 = vld [vmem:[#allocation10 + $0x10] sm:$0xff]
        %v1401 = vld [vmem:[#allocation10 + $0x18] sm:$0xff]
        %v1402 = vld [vmem:[#allocation10 + $0x20] sm:$0xff]
        %v1403 = vld [vmem:[#allocation10 + $0x28] sm:$0xff]
        %v1404 = vld [vmem:[#allocation10 + $0x30] sm:$0xff]
        %v1405 = vld [vmem:[#allocation10 + $0x38] sm:$0xff]
        %v1406 = vld [vmem:[#allocation10 + $0x40] sm:$0xff]
        %v1407 = vld [vmem:[#allocation10 + $0x48] sm:$0xff]
        %v1408 = vld [vmem:[#allocation10 + $0x50] sm:$0xff]
        %v1409 = vld [vmem:[#allocation10 + $0x58] sm:$0xff]
        %v1410 = vld [vmem:[#allocation10 + $0x60] sm:$0xff]
        %v1411 = vld [vmem:[#allocation10 + $0x68] sm:$0xff]
        %v1412 = vld [vmem:[#allocation10 + $0x70] sm:$0xff]
        %v1413 = vld [vmem:[#allocation10 + $0x78] sm:$0xff]
        %v1414 = vld [vmem:[#allocation10 + $0x80] sm:$0xff]
        %v1415 = vld [vmem:[#allocation10 + $0x88] sm:$0xff]
        %v1416 = vld [vmem:[#allocation10 + $0x90] sm:$0xff]
        %v1417 = vld [vmem:[#allocation10 + $0x98] sm:$0xff]
        %v1418 = vld [vmem:[#allocation10 + $0xa0] sm:$0xff]
        %v1419 = vld [vmem:[#allocation10 + $0xa8] sm:$0xff]
        %v1420 = vld [vmem:[#allocation10 + $0xb0] sm:$0xff]
        %v1421 = vld [vmem:[#allocation10 + $0xb8] sm:$0xff]
        %v1422 = vld [vmem:[#allocation10 + $0xc0] sm:$0xff]
        %v1423 = vld [vmem:[#allocation10 + $0xc8] sm:$0xff]
        %v1424 = vld [vmem:[#allocation10 + $0xd0] sm:$0xff]
        %v1425 = vld [vmem:[#allocation10 + $0xd8] sm:$0xff]
        %v1426 = vld [vmem:[#allocation10 + $0xe0] sm:$0xff]
        %v1427 = vld [vmem:[#allocation10 + $0xe8] sm:$0xff]
        %v1428 = vld [vmem:[#allocation10 + $0xf0] sm:$0xff]
        %v1429 = vld [vmem:[#allocation10 + $0xf8] sm:$0xff]
        %v1430 = vld [vmem:[#allocation11] sm:$0x3]
        %v1432 = vlaneseq
        %v1433 = vshrl.u32 %v1432, 7
        %v1434 = vsub.s32 0, %v1433
        %v1435 = vrot.slane %v1430, %v1434
        %v1436 = vlaneseq
        %v1437 = vshrl.u32 %v1436, 7
        %v1438 = vsub.s32 1, %v1437
        %v1439 = vrot.slane %v1430, %v1438
        %1442 = vmatprep.subr.mxu0 %v1429
        %1443 = vmatpush1.msra.mxu0 %v1428
        %1444 = vmatprep.subr.mxu0 %v1427
        %1445 = vmatpush1.msra.mxu0 %v1426
        %1446 = vmatprep.subr.mxu0 %v1425
        %1447 = vmatpush1.msra.mxu0 %v1424
        %1448 = vmatprep.subr.mxu0 %v1423
        %1449 = vmatpush1.msra.mxu0 %v1422
        %1450 = vmatprep.subr.mxu0 %v1421
        %1451 = vmatpush1.msra.mxu0 %v1420
        %1452 = vmatprep.subr.mxu0 %v1419
        %1453 = vmatpush1.msra.mxu0 %v1418
        %1454 = vmatprep.subr.mxu0 %v1417
        %1455 = vmatpush1.msra.mxu0 %v1416
        %1456 = vmatprep.subr.mxu0 %v1415
        %1457 = vmatpush1.msra.mxu0 %v1414
        %1458 = vmatprep.subr.mxu0 %v1413
        %1459 = vmatpush1.msra.mxu0 %v1412
        %1460 = vmatprep.subr.mxu0 %v1411
        %1461 = vmatpush1.msra.mxu0 %v1410
        %1462 = vmatprep.subr.mxu0 %v1409
        %1463 = vmatpush1.msra.mxu0 %v1408
        %1464 = vmatprep.subr.mxu0 %v1407
        %1465 = vmatpush1.msra.mxu0 %v1406
        %1466 = vmatprep.subr.mxu0 %v1405
        %1467 = vmatpush1.msra.mxu0 %v1404
        %1468 = vmatprep.subr.mxu0 %v1403
        %1469 = vmatpush1.msra.mxu0 %v1402
        %1470 = vmatprep.subr.mxu0 %v1401
        %1471 = vmatpush1.msra.mxu0 %v1400
        %1472 = vmatprep.subr.mxu0 %v1399
        %1473 = vmatpush1.msra.mxu0 %v1398
        %1474 = vmatprep.subr.mxu0 0.0
        %1475 = vmatpush2.msra.mxu0 0.0
        %1476 = vmatprep.subr.mxu0 0.0
        %1477 = vmatpush2.msra.mxu0 0.0
        %1478 = vmatprep.subr.mxu0 0.0
        %1479 = vmatpush2.msra.mxu0 0.0
        %1480 = vmatprep.subr.mxu0 0.0
        %1481 = vmatpush2.msra.mxu0 0.0
        %1482 = vmatprep.subr.mxu0 0.0
        %1483 = vmatpush2.msra.mxu0 0.0
        %1484 = vmatprep.subr.mxu0 0.0
        %1485 = vmatpush2.msra.mxu0 0.0
        %1486 = vmatprep.subr.mxu0 0.0
        %1487 = vmatpush2.msra.mxu0 0.0
        %1488 = vmatprep.subr.mxu0 0.0
        %1489 = vmatpush2.msra.mxu0 0.0
        %1490 = vmatprep.subr.mxu0 0.0
        %1491 = vmatpush2.msra.mxu0 0.0
        %1492 = vmatprep.subr.mxu0 0.0
        %1493 = vmatpush2.msra.mxu0 0.0
        %1494 = vmatprep.subr.mxu0 0.0
        %1495 = vmatpush2.msra.mxu0 0.0
        %1496 = vmatprep.subr.mxu0 0.0
        %1497 = vmatpush2.msra.mxu0 0.0
        %1498 = vmatprep.subr.mxu0 0.0
        %1499 = vmatpush2.msra.mxu0 0.0
        %1500 = vmatprep.subr.mxu0 0.0
        %1501 = vmatpush2.msra.mxu0 0.0
        %1502 = vmatprep.subr.mxu0 0.0
        %1503 = vmatpush2.msra.mxu0 0.0
        %1504 = vmatprep.subr.mxu0 0.0
        %1505 = vmatpush2.msra.mxu0 0.0
        %1506 = vmatprep.mubr.f32.mxu0 0.0
        %1507 = vmatmul.mubr.f32.gmra.mxu0 %v1382
        %v1508 = vpop.f32.mrf.mxu0
        %v1509 = vadd.f32 %v1435, %v1508
        %v1510 = vpop.f32.mrf.mxu0
        %v1511 = vadd.f32 %v1439, %v1510
        %1512 = vmatprep.mubr.f32.mxu0 0.0
        %1513 = vmatmul.mubr.f32.gmra.mxu0 %v1383
        %v1514 = vpop.f32.mrf.mxu0
        %v1515 = vadd.f32 %v1435, %v1514
        %v1516 = vpop.f32.mrf.mxu0
        %v1517 = vadd.f32 %v1439, %v1516
        %1518 = vmatprep.mubr.f32.mxu0 0.0
        %1519 = vmatmul.mubr.f32.gmra.mxu0 %v1384
        %v1520 = vpop.f32.mrf.mxu0
        %v1521 = vadd.f32 %v1435, %v1520
        %v1522 = vpop.f32.mrf.mxu0
        %v1523 = vadd.f32 %v1439, %v1522
        %1524 = vmatprep.mubr.f32.mxu0 0.0
        %1525 = vmatmul.mubr.f32.gmra.mxu0 %v1385
        %v1526 = vpop.f32.mrf.mxu0
        %v1527 = vadd.f32 %v1435, %v1526
        %v1528 = vpop.f32.mrf.mxu0
        %v1529 = vadd.f32 %v1439, %v1528
        %1530 = vmatprep.mubr.f32.mxu0 0.0
        %1531 = vmatmul.mubr.f32.gmra.mxu0 %v1386
        %v1532 = vpop.f32.mrf.mxu0
        %v1533 = vadd.f32 %v1435, %v1532
        %v1534 = vpop.f32.mrf.mxu0
        %v1535 = vadd.f32 %v1439, %v1534
        %1536 = vmatprep.mubr.f32.mxu0 0.0
        %1537 = vmatmul.mubr.f32.gmra.mxu0 %v1387
        %v1538 = vpop.f32.mrf.mxu0
        %v1539 = vadd.f32 %v1435, %v1538
        %v1540 = vpop.f32.mrf.mxu0
        %v1541 = vadd.f32 %v1439, %v1540
        %1542 = vmatprep.mubr.f32.mxu0 0.0
        %1543 = vmatmul.mubr.f32.gmra.mxu0 %v1388
        %v1544 = vpop.f32.mrf.mxu0
        %v1545 = vadd.f32 %v1435, %v1544
        %v1546 = vpop.f32.mrf.mxu0
        %v1547 = vadd.f32 %v1439, %v1546
        %1548 = vmatprep.mubr.f32.mxu0 0.0
        %1549 = vmatmul.mubr.f32.gmra.mxu0 %v1389
        %v1550 = vpop.f32.mrf.mxu0
        %v1551 = vadd.f32 %v1435, %v1550
        %v1552 = vpop.f32.mrf.mxu0
        %v1553 = vadd.f32 %v1439, %v1552
        %1554 = vmatprep.mubr.f32.mxu0 0.0
        %1555 = vmatmul.mubr.f32.gmra.mxu0 %v1390
        %v1556 = vpop.f32.mrf.mxu0
        %v1557 = vadd.f32 %v1435, %v1556
        %v1558 = vpop.f32.mrf.mxu0
        %v1559 = vadd.f32 %v1439, %v1558
        %1560 = vmatprep.mubr.f32.mxu0 0.0
        %1561 = vmatmul.mubr.f32.gmra.mxu0 %v1391
        %v1562 = vpop.f32.mrf.mxu0
        %v1563 = vadd.f32 %v1435, %v1562
        %v1564 = vpop.f32.mrf.mxu0
        %v1565 = vadd.f32 %v1439, %v1564
        %1566 = vmatprep.mubr.f32.mxu0 0.0
        %1567 = vmatmul.mubr.f32.gmra.mxu0 %v1392
        %v1568 = vpop.f32.mrf.mxu0
        %v1569 = vadd.f32 %v1435, %v1568
        %v1570 = vpop.f32.mrf.mxu0
        %v1571 = vadd.f32 %v1439, %v1570
        %1572 = vmatprep.mubr.f32.mxu0 0.0
        %1573 = vmatmul.mubr.f32.gmra.mxu0 %v1393
        %v1574 = vpop.f32.mrf.mxu0
        %v1575 = vadd.f32 %v1435, %v1574
        %v1576 = vpop.f32.mrf.mxu0
        %v1577 = vadd.f32 %v1439, %v1576
        %1578 = vmatprep.mubr.f32.mxu0 0.0
        %1579 = vmatmul.mubr.f32.gmra.mxu0 %v1394
        %v1580 = vpop.f32.mrf.mxu0
        %v1581 = vadd.f32 %v1435, %v1580
        %v1582 = vpop.f32.mrf.mxu0
        %v1583 = vadd.f32 %v1439, %v1582
        %1584 = vmatprep.mubr.f32.mxu0 0.0
        %1585 = vmatmul.mubr.f32.gmra.mxu0 %v1395
        %v1586 = vpop.f32.mrf.mxu0
        %v1587 = vadd.f32 %v1435, %v1586
        %v1588 = vpop.f32.mrf.mxu0
        %v1589 = vadd.f32 %v1439, %v1588
        %1590 = vmatprep.mubr.f32.mxu0 0.0
        %1591 = vmatmul.mubr.f32.gmra.mxu0 %v1396
        %v1592 = vpop.f32.mrf.mxu0
        %v1593 = vadd.f32 %v1435, %v1592
        %v1594 = vpop.f32.mrf.mxu0
        %v1595 = vadd.f32 %v1439, %v1594
        %1596 = vmatprep.mubr.f32.mxu0 0.0
        %1597 = vmatmul.mubr.f32.gmra.mxu0 %v1397
        %v1598 = vpop.f32.mrf.mxu0
        %v1599 = vadd.f32 %v1435, %v1598
        %v1600 = vpop.f32.mrf.mxu0
        %v1601 = vadd.f32 %v1439, %v1600
        %1602 = vdwg.mxu0
        %v1603 = vtanh.pop %v1509
        %v1604 = vtanh.pop %v1511
        %v1605 = vtanh.pop %v1515
        %v1606 = vtanh.pop %v1517
        %v1607 = vtanh.pop %v1521
        %v1608 = vtanh.pop %v1523
        %v1609 = vtanh.pop %v1527
        %v1610 = vtanh.pop %v1529
        %v1611 = vtanh.pop %v1533
        %v1612 = vtanh.pop %v1535
        %v1613 = vtanh.pop %v1539
        %v1614 = vtanh.pop %v1541
        %v1615 = vtanh.pop %v1545
        %v1616 = vtanh.pop %v1547
        %v1617 = vtanh.pop %v1551
        %v1618 = vtanh.pop %v1553
        %v1619 = vtanh.pop %v1557
        %v1620 = vtanh.pop %v1559
        %v1621 = vtanh.pop %v1563
        %v1622 = vtanh.pop %v1565
        %v1623 = vtanh.pop %v1569
        %v1624 = vtanh.pop %v1571
        %v1625 = vtanh.pop %v1575
        %v1626 = vtanh.pop %v1577
        %v1627 = vtanh.pop %v1581
        %v1628 = vtanh.pop %v1583
        %v1629 = vtanh.pop %v1587
        %v1630 = vtanh.pop %v1589
        %v1631 = vtanh.pop %v1593
        %v1632 = vtanh.pop %v1595
        %v1633 = vtanh.pop %v1599
        %v1634 = vtanh.pop %v1601
        %v1635 = vmax.f32 %v1603, %v1605
        %v1636 = vrot.slane %v1635, 4
        %v1637 = vmax.f32 %v1635, %v1636
        %v1638 = vrot.slane %v1637, 2
        %v1639 = vmax.f32 %v1637, %v1638
        %v1640 = vrot.slane %v1639, 1
        %v1641 = vmax.f32 %v1639, %v1640
        %v1642 = vmax.f32 %v1604, %v1606
        %v1643 = vrot.slane %v1642, 4
        %v1644 = vmax.f32 %v1642, %v1643
        %v1645 = vrot.slane %v1644, 2
        %v1646 = vmax.f32 %v1644, %v1645
        %v1647 = vrot.slane %v1646, 1
        %v1648 = vmax.f32 %v1646, %v1647
        %v1649 = vmax.f32 %v1607, %v1609
        %v1650 = vrot.slane %v1649, 4
        %v1651 = vmax.f32 %v1649, %v1650
        %v1652 = vrot.slane %v1651, 2
        %v1653 = vmax.f32 %v1651, %v1652
        %v1654 = vrot.slane %v1653, 1
        %v1655 = vmax.f32 %v1653, %v1654
        %v1656 = vmax.f32 %v1608, %v1610
        %v1657 = vrot.slane %v1656, 4
        %v1658 = vmax.f32 %v1656, %v1657
        %v1659 = vrot.slane %v1658, 2
        %v1660 = vmax.f32 %v1658, %v1659
        %v1661 = vrot.slane %v1660, 1
        %v1662 = vmax.f32 %v1660, %v1661
        %v1663 = vmax.f32 %v1611, %v1613
        %v1664 = vrot.slane %v1663, 4
        %v1665 = vmax.f32 %v1663, %v1664
        %v1666 = vrot.slane %v1665, 2
        %v1667 = vmax.f32 %v1665, %v1666
        %v1668 = vrot.slane %v1667, 1
        %v1669 = vmax.f32 %v1667, %v1668
        %v1670 = vmax.f32 %v1612, %v1614
        %v1671 = vrot.slane %v1670, 4
        %v1672 = vmax.f32 %v1670, %v1671
        %v1673 = vrot.slane %v1672, 2
        %v1674 = vmax.f32 %v1672, %v1673
        %v1675 = vrot.slane %v1674, 1
        %v1676 = vmax.f32 %v1674, %v1675
        %v1677 = vmax.f32 %v1615, %v1617
        %v1678 = vrot.slane %v1677, 4
        %v1679 = vmax.f32 %v1677, %v1678
        %v1680 = vrot.slane %v1679, 2
        %v1681 = vmax.f32 %v1679, %v1680
        %v1682 = vrot.slane %v1681, 1
        %v1683 = vmax.f32 %v1681, %v1682
        %v1684 = vmax.f32 %v1616, %v1618
        %v1685 = vrot.slane %v1684, 4
        %v1686 = vmax.f32 %v1684, %v1685
        %v1687 = vrot.slane %v1686, 2
        %v1688 = vmax.f32 %v1686, %v1687
        %v1689 = vrot.slane %v1688, 1
        %v1690 = vmax.f32 %v1688, %v1689
        %v1691 = vmax.f32 %v1619, %v1621
        %v1692 = vrot.slane %v1691, 4
        %v1693 = vmax.f32 %v1691, %v1692
        %v1694 = vrot.slane %v1693, 2
        %v1695 = vmax.f32 %v1693, %v1694
        %v1696 = vrot.slane %v1695, 1
        %v1697 = vmax.f32 %v1695, %v1696
        %v1698 = vmax.f32 %v1620, %v1622
        %v1699 = vrot.slane %v1698, 4
        %v1700 = vmax.f32 %v1698, %v1699
        %v1701 = vrot.slane %v1700, 2
        %v1702 = vmax.f32 %v1700, %v1701
        %v1703 = vrot.slane %v1702, 1
        %v1704 = vmax.f32 %v1702, %v1703
        %v1705 = vmax.f32 %v1623, %v1625
        %v1706 = vrot.slane %v1705, 4
        %v1707 = vmax.f32 %v1705, %v1706
        %v1708 = vrot.slane %v1707, 2
        %v1709 = vmax.f32 %v1707, %v1708
        %v1710 = vrot.slane %v1709, 1
        %v1711 = vmax.f32 %v1709, %v1710
        %v1712 = vmax.f32 %v1624, %v1626
        %v1713 = vrot.slane %v1712, 4
        %v1714 = vmax.f32 %v1712, %v1713
        %v1715 = vrot.slane %v1714, 2
        %v1716 = vmax.f32 %v1714, %v1715
        %v1717 = vrot.slane %v1716, 1
        %v1718 = vmax.f32 %v1716, %v1717
        %v1719 = vmax.f32 %v1627, %v1629
        %v1720 = vrot.slane %v1719, 4
        %v1721 = vmax.f32 %v1719, %v1720
        %v1722 = vrot.slane %v1721, 2
        %v1723 = vmax.f32 %v1721, %v1722
        %v1724 = vrot.slane %v1723, 1
        %v1725 = vmax.f32 %v1723, %v1724
        %v1726 = vmax.f32 %v1628, %v1630
        %v1727 = vrot.slane %v1726, 4
        %v1728 = vmax.f32 %v1726, %v1727
        %v1729 = vrot.slane %v1728, 2
        %v1730 = vmax.f32 %v1728, %v1729
        %v1731 = vrot.slane %v1730, 1
        %v1732 = vmax.f32 %v1730, %v1731
        %v1733 = vmax.f32 %v1631, %v1633
        %v1734 = vrot.slane %v1733, 4
        %v1735 = vmax.f32 %v1733, %v1734
        %v1736 = vrot.slane %v1735, 2
        %v1737 = vmax.f32 %v1735, %v1736
        %v1738 = vrot.slane %v1737, 1
        %v1739 = vmax.f32 %v1737, %v1738
        %v1740 = vmax.f32 %v1632, %v1634
        %v1741 = vrot.slane %v1740, 4
        %v1742 = vmax.f32 %v1740, %v1741
        %v1743 = vrot.slane %v1742, 2
        %v1744 = vmax.f32 %v1742, %v1743
        %v1745 = vrot.slane %v1744, 1
        %v1746 = vmax.f32 %v1744, %v1745
        %v1747 = vld [vmem:[#allocation13] sm:$0xff]
        %v1748 = vld [vmem:[#allocation13 + $0x8] sm:$0xff]
        %v1749 = vld [vmem:[#allocation13 + $0x10] sm:$0xff]
        %v1750 = vld [vmem:[#allocation13 + $0x18] sm:$0xff]
        %v1751 = vld [vmem:[#allocation13 + $0x20] sm:$0xff]
        %v1752 = vld [vmem:[#allocation13 + $0x28] sm:$0xff]
        %v1753 = vld [vmem:[#allocation13 + $0x30] sm:$0xff]
        %v1754 = vld [vmem:[#allocation13 + $0x38] sm:$0xff]
        %v1755 = vld [vmem:[#allocation13 + $0x40] sm:$0xff]
        %v1756 = vld [vmem:[#allocation13 + $0x48] sm:$0xff]
        %v1757 = vld [vmem:[#allocation13 + $0x50] sm:$0xff]
        %v1758 = vld [vmem:[#allocation13 + $0x58] sm:$0xff]
        %v1759 = vld [vmem:[#allocation13 + $0x60] sm:$0xff]
        %v1760 = vld [vmem:[#allocation13 + $0x68] sm:$0xff]
        %v1761 = vld [vmem:[#allocation13 + $0x70] sm:$0xff]
        %v1762 = vld [vmem:[#allocation13 + $0x78] sm:$0xff]
        %v1763 = vld [vmem:[#allocation13 + $0x80] sm:$0xff]
        %v1764 = vld [vmem:[#allocation13 + $0x88] sm:$0xff]
        %v1765 = vld [vmem:[#allocation13 + $0x90] sm:$0xff]
        %v1766 = vld [vmem:[#allocation13 + $0x98] sm:$0xff]
        %v1767 = vld [vmem:[#allocation13 + $0xa0] sm:$0xff]
        %v1768 = vld [vmem:[#allocation13 + $0xa8] sm:$0xff]
        %v1769 = vld [vmem:[#allocation13 + $0xb0] sm:$0xff]
        %v1770 = vld [vmem:[#allocation13 + $0xb8] sm:$0xff]
        %v1771 = vld [vmem:[#allocation13 + $0xc0] sm:$0xff]
        %v1772 = vld [vmem:[#allocation13 + $0xc8] sm:$0xff]
        %v1773 = vld [vmem:[#allocation13 + $0xd0] sm:$0xff]
        %v1774 = vld [vmem:[#allocation13 + $0xd8] sm:$0xff]
        %v1775 = vld [vmem:[#allocation13 + $0xe0] sm:$0xff]
        %v1776 = vld [vmem:[#allocation13 + $0xe8] sm:$0xff]
        %v1777 = vld [vmem:[#allocation13 + $0xf0] sm:$0xff]
        %v1778 = vld [vmem:[#allocation13 + $0xf8] sm:$0xff]
        %v1779 = vld [vmem:[#allocation14] sm:$0x1]
        %v1781 = vlaneseq
        %v1782 = vshrl.u32 %v1781, 7
        %v1783 = vsub.s32 0, %v1782
        %v1784 = vrot.slane %v1779, %v1783
        %vm1802 = vcmask 1041409
        %v1803 = vsel %vm1802, %v1655, %v1641
        %vm1804 = vcmask 1042434
        %v1805 = vsel %vm1804, %v1669, %v1803
        %vm1806 = vcmask 1043459
        %v1807 = vsel %vm1806, %v1683, %v1805
        %vm1808 = vcmask 1044484
        %v1809 = vsel %vm1808, %v1697, %v1807
        %vm1810 = vcmask 1045509
        %v1811 = vsel %vm1810, %v1711, %v1809
        %vm1812 = vcmask 1046534
        %v1813 = vsel %vm1812, %v1725, %v1811
        %vm1814 = vcmask 1047559
        %v1815 = vsel %vm1814, %v1739, %v1813
        %v1816 = vsel %vm1802, %v1662, %v1648
        %v1817 = vsel %vm1804, %v1676, %v1816
        %v1818 = vsel %vm1806, %v1690, %v1817
        %v1819 = vsel %vm1808, %v1704, %v1818
        %v1820 = vsel %vm1810, %v1718, %v1819
        %v1821 = vsel %vm1812, %v1732, %v1820
        %v1822 = vsel %vm1814, %v1746, %v1821
        %1825 = vmatprep.subr.mxu0 0.0
        %1826 = vmatpush1.msra.mxu0 %v1762
        %1827 = vmatprep.subr.mxu0 0.0
        %1828 = vmatpush1.msra.mxu0 %v1761
        %1829 = vmatprep.subr.mxu0 0.0
        %1830 = vmatpush1.msra.mxu0 %v1760
        %1831 = vmatprep.subr.mxu0 0.0
        %1832 = vmatpush1.msra.mxu0 %v1759
        %1833 = vmatprep.subr.mxu0 0.0
        %1834 = vmatpush1.msra.mxu0 %v1758
        %1835 = vmatprep.subr.mxu0 0.0
        %1836 = vmatpush1.msra.mxu0 %v1757
        %1837 = vmatprep.subr.mxu0 0.0
        %1838 = vmatpush1.msra.mxu0 %v1756
        %1839 = vmatprep.subr.mxu0 0.0
        %1840 = vmatpush1.msra.mxu0 %v1755
        %1841 = vmatprep.subr.mxu0 0.0
        %1842 = vmatpush1.msra.mxu0 %v1754
        %1843 = vmatprep.subr.mxu0 0.0
        %1844 = vmatpush1.msra.mxu0 %v1753
        %1845 = vmatprep.subr.mxu0 0.0
        %1846 = vmatpush1.msra.mxu0 %v1752
        %1847 = vmatprep.subr.mxu0 0.0
        %1848 = vmatpush1.msra.mxu0 %v1751
        %1849 = vmatprep.subr.mxu0 0.0
        %1850 = vmatpush1.msra.mxu0 %v1750
        %1851 = vmatprep.subr.mxu0 0.0
        %1852 = vmatpush1.msra.mxu0 %v1749
        %1853 = vmatprep.subr.mxu0 0.0
        %1854 = vmatpush1.msra.mxu0 %v1748
        %1855 = vmatprep.subr.mxu0 0.0
        %1856 = vmatpush1.msra.mxu0 %v1747
        %1857 = vmatprep.subr.mxu0 0.0
        %1858 = vmatpush2.msra.mxu0 %v1778
        %1859 = vmatprep.subr.mxu0 0.0
        %1860 = vmatpush2.msra.mxu0 %v1777
        %1861 = vmatprep.subr.mxu0 0.0
        %1862 = vmatpush2.msra.mxu0 %v1776
        %1863 = vmatprep.subr.mxu0 0.0
        %1864 = vmatpush2.msra.mxu0 %v1775
        %1865 = vmatprep.subr.mxu0 0.0
        %1866 = vmatpush2.msra.mxu0 %v1774
        %1867 = vmatprep.subr.mxu0 0.0
        %1868 = vmatpush2.msra.mxu0 %v1773
        %1869 = vmatprep.subr.mxu0 0.0
        %1870 = vmatpush2.msra.mxu0 %v1772
        %1871 = vmatprep.subr.mxu0 0.0
        %1872 = vmatpush2.msra.mxu0 %v1771
        %1873 = vmatprep.subr.mxu0 0.0
        %1874 = vmatpush2.msra.mxu0 %v1770
        %1875 = vmatprep.subr.mxu0 0.0
        %1876 = vmatpush2.msra.mxu0 %v1769
        %1877 = vmatprep.subr.mxu0 0.0
        %1878 = vmatpush2.msra.mxu0 %v1768
        %1879 = vmatprep.subr.mxu0 0.0
        %1880 = vmatpush2.msra.mxu0 %v1767
        %1881 = vmatprep.subr.mxu0 0.0
        %1882 = vmatpush2.msra.mxu0 %v1766
        %1883 = vmatprep.subr.mxu0 0.0
        %1884 = vmatpush2.msra.mxu0 %v1765
        %1885 = vmatprep.subr.mxu0 0.0
        %1886 = vmatpush2.msra.mxu0 %v1764
        %1887 = vmatprep.subr.mxu0 0.0
        %1888 = vmatpush2.msra.mxu0 %v1763
        %1889 = vmatprep.mubr.f32.mxu0 %v1822
        %1890 = vmatmul.mubr.f32.gmra.mxu0 %v1815
        %v1891 = vpop.f32.mrf.mxu0
        %v1892 = vadd.f32 %v1784, %v1891
        %v1893 = vpop.f32.mrf.mxu0
        %1894 = vdwg.mxu0
        %v1895 = vtanh.pop %v1892
        %v1896 = vld [vmem:[%s9] sm:$0xff]
        %v1897 = vld [vmem:[%s9 + $0x8] sm:$0xff]
        %v1898 = vld [vmem:[%s9 + $0x10] sm:$0xff]
        %v1899 = vld [vmem:[%s9 + $0x18] sm:$0xff]
        %v1900 = vld [vmem:[%s9 + $0x20] sm:$0xff]
        %v1901 = vld [vmem:[%s9 + $0x28] sm:$0xff]
        %v1902 = vld [vmem:[%s9 + $0x30] sm:$0xff]
        %v1903 = vld [vmem:[%s9 + $0x38] sm:$0xff]
        %v1904 = vld [vmem:[%s9 + $0x40] sm:$0xff]
        %v1905 = vld [vmem:[%s9 + $0x48] sm:$0xff]
        %v1906 = vld [vmem:[%s9 + $0x50] sm:$0xff]
        %v1907 = vld [vmem:[%s9 + $0x58] sm:$0xff]
        %v1908 = vld [vmem:[%s9 + $0x60] sm:$0xff]
        %v1909 = vld [vmem:[%s9 + $0x68] sm:$0xff]
        %v1910 = vld [vmem:[%s9 + $0x70] sm:$0xff]
        %v1911 = vld [vmem:[%s9 + $0x78] sm:$0xff]
        %v1912 = vld [vmem:[%s10] sm:$0x1]
        %v1914 = vlaneseq
        %v1915 = vshrl.u32 %v1914, 7
        %v1916 = vsub.s32 0, %v1915
        %v1917 = vrot.slane %v1912, %v1916
        %1919 = vmatprep.subr.mxu0 0.0
        %1920 = vmatpush1.msra.mxu0 %v1911
        %1921 = vmatprep.subr.mxu0 0.0
        %1922 = vmatpush1.msra.mxu0 %v1910
        %1923 = vmatprep.subr.mxu0 0.0
        %1924 = vmatpush1.msra.mxu0 %v1909
        %1925 = vmatprep.subr.mxu0 0.0
        %1926 = vmatpush1.msra.mxu0 %v1908
        %1927 = vmatprep.subr.mxu0 0.0
        %1928 = vmatpush1.msra.mxu0 %v1907
        %1929 = vmatprep.subr.mxu0 0.0
        %1930 = vmatpush1.msra.mxu0 %v1906
        %1931 = vmatprep.subr.mxu0 0.0
        %1932 = vmatpush1.msra.mxu0 %v1905
        %1933 = vmatprep.subr.mxu0 0.0
        %1934 = vmatpush1.msra.mxu0 %v1904
        %1935 = vmatprep.subr.mxu0 0.0
        %1936 = vmatpush1.msra.mxu0 %v1903
        %1937 = vmatprep.subr.mxu0 0.0
        %1938 = vmatpush1.msra.mxu0 %v1902
        %1939 = vmatprep.subr.mxu0 0.0
        %1940 = vmatpush1.msra.mxu0 %v1901
        %1941 = vmatprep.subr.mxu0 0.0
        %1942 = vmatpush1.msra.mxu0 %v1900
        %1943 = vmatprep.subr.mxu0 0.0
        %1944 = vmatpush1.msra.mxu0 %v1899
        %1945 = vmatprep.subr.mxu0 0.0
        %1946 = vmatpush1.msra.mxu0 %v1898
        %1947 = vmatprep.subr.mxu0 0.0
        %1948 = vmatpush1.msra.mxu0 %v1897
        %1949 = vmatprep.subr.mxu0 0.0
        %1950 = vmatpush1.msra.mxu0 %v1896
        %1951 = vmatprep.subr.mxu0 0.0
        %1952 = vmatpush2.msra.mxu0 0.0
        %1953 = vmatprep.subr.mxu0 0.0
        %1954 = vmatpush2.msra.mxu0 0.0
        %1955 = vmatprep.subr.mxu0 0.0
        %1956 = vmatpush2.msra.mxu0 0.0
        %1957 = vmatprep.subr.mxu0 0.0
        %1958 = vmatpush2.msra.mxu0 0.0
        %1959 = vmatprep.subr.mxu0 0.0
        %1960 = vmatpush2.msra.mxu0 0.0
        %1961 = vmatprep.subr.mxu0 0.0
        %1962 = vmatpush2.msra.mxu0 0.0
        %1963 = vmatprep.subr.mxu0 0.0
        %1964 = vmatpush2.msra.mxu0 0.0
        %1965 = vmatprep.subr.mxu0 0.0
        %1966 = vmatpush2.msra.mxu0 0.0
        %1967 = vmatprep.subr.mxu0 0.0
        %1968 = vmatpush2.msra.mxu0 0.0
        %1969 = vmatprep.subr.mxu0 0.0
        %1970 = vmatpush2.msra.mxu0 0.0
        %1971 = vmatprep.subr.mxu0 0.0
        %1972 = vmatpush2.msra.mxu0 0.0
        %1973 = vmatprep.subr.mxu0 0.0
        %1974 = vmatpush2.msra.mxu0 0.0
        %1975 = vmatprep.subr.mxu0 0.0
        %1976 = vmatpush2.msra.mxu0 0.0
        %1977 = vmatprep.subr.mxu0 0.0
        %1978 = vmatpush2.msra.mxu0 0.0
        %1979 = vmatprep.subr.mxu0 0.0
        %1980 = vmatpush2.msra.mxu0 0.0
        %1981 = vmatprep.subr.mxu0 0.0
        %1982 = vmatpush2.msra.mxu0 0.0
        %1983 = vmatprep.mubr.f32.mxu0 0.0
        %1984 = vmatmul.mubr.f32.gmra.mxu0 %v1895
        %v1985 = vpop.f32.mrf.mxu0
        %v1986 = vadd.f32 %v1917, %v1985
        %v1987 = vpop.f32.mrf.mxu0
        %1988 = vdwg.mxu0
        %v1989 = vtanh.pop %v1986
        %v1990 = vlaneseq
        %v1991 = vand.u32 %v1990, 127
        %vm1992 = vcmp.lt.s32.totalorder %v1991, 8
        %v1993 = vsel %vm1992, %v1989, -inf
        %1994 = vmax.xlane.f32.xlu0 %v1993
        %v1995 = vpop.xlane.xlu0 %1994
        %v1996 = vsub.f32 %v1993, %v1995
        %v1997 = vmul.f32 %v1996, 1.442695
        %v1998 = vpow.pop %v1997
        %1999 = vadd.xlane.f32.xlu0 %v1998
        %v2000 = vpop.xlane.xlu0 %1999
        %v2001 = vlog2.pop %v2000
        %v2002 = vmul.f32 %v2001, 0.6931472
        %v2003 = vsub.f32 %v1996, %v2002
        %2004 = vst [vmem:[%s487] sm:$0xff] %v2003
        %s2005 = sand.u32 %s274, 1
        %s2006 = scalar_lea.sflag [#allocation4], %s2005
        %s2007 = sand.u32 %s274, 1
        %s2008 = smul.addr %s2007, 8
        %s2009 = scalar_lea.vmem [#allocation16], %s2008
        // Predicated region
        $region97: #{tpu_custom_call.1} parent=63 // pred_check
          %p2010 = pneg %p284
        $region98: #{tpu_custom_call.1} parent=63 // pred_check_branch
          %2012 = sbr.rel (%p2010) target = $region100
        $region99: #{tpu_custom_call.1} parent=63 // pred_region
          %s2014 = ssub.s32 128, 128
          %2015 = vsyncadd %s2006, %s2014
          %s2016 = smul.addr %s30, 128
          %s2017 = scalar_lea.hbm %s11, %s2016
          %s2019 = sshll.u32 %s2009, 4
          %s2020 = int_to_ptr.vmem [resolvable:$true] %s2019
          %2022 = dma.vmem_to_hbm [thread:$0]  %s2020, 128, %s2017, %s2006
        $region100: #{tpu_custom_call.1} parent=63 // pred_fallthru
          _
      $region64: #{tpu_custom_call.1} parent=5 // pred_fallthru
        _
      %p2023 = scmp.le.s32.totalorder 2, %s25
      // Predicated region
      $region101: #{tpu_custom_call.1} parent=5 // pred_check
        %p2024 = pneg %p2023
      $region102: #{tpu_custom_call.1} parent=5 // pred_check_branch
        %2026 = sbr.rel (%p2024) target = $region104
      $region103: #{tpu_custom_call.1} parent=5 // pred_region
        %s2027 = ssub.s32 %s25, 2
        // Predicated region
        $region105: #{tpu_custom_call.1} parent=103 // pred_check
          %p2028 = pneg %p290
        $region106: #{tpu_custom_call.1} parent=103 // pred_check_branch
          %2030 = sbr.rel (%p2028) target = $region108
        $region107: #{tpu_custom_call.1} parent=103 // pred_region
          %s2031 = sand.u32 %s275, 1
          %s2032 = scalar_lea.sflag [#allocation4], %s2031
          %s2033 = sand.u32 %s275, 1
          %s2034 = smul.addr %s2033, 8
          %s2035 = scalar_lea.vmem [#allocation16], %s2034
          %2036 = dma.done %s2032, 128
        $region108: #{tpu_custom_call.1} parent=103 // pred_fallthru
          _
      $region104: #{tpu_custom_call.1} parent=5 // pred_fallthru
        _
    $region6: #{tpu_custom_call.1} parent=1 // loop_footer
      %s29 = sadd.s32 1, %s25
    $region7: #{tpu_custom_call.1} parent=1 // loop_footer_branch
      %24 = sbr.rel target = $region3
    $region8: #{tpu_custom_call.1} parent=1 // loop_exit
      _
    %2037 = vsyncpa [#allocation3], 1
    %s2038 = scalar_lea.sflag [#allocation3], 1
    %2039 = vsyncpa %s2038, 1
    %2040 = vsyncpa [#allocation6], 1
    %2041 = vsyncpa [#allocation9], 1
    %2042 = vsyncpa [#allocation12], 1
    %2043 = vsyncpa [#allocation15], 1
    %2044 = vsyncpa [#allocation4], 1
    %s2045 = scalar_lea.sflag [#allocation4], 1
    %2046 = vsyncpa %s2045, 1

</llo_original>
